<compile_context>
chip_gen: v6e
topology: v6e:2x2x1
jax: 0.10.0
libtpu: 0.0.40
codegen_flags: <defaults>
</compile_context>

<pallas_src>
import functools
import math

import jax
import jax.numpy as jnp
from jax.experimental import pallas as pl
from jax.experimental.pallas import tpu as pltpu


def _layer_norm(x, gamma, beta, eps=1e-5):
    mu = jnp.mean(x, axis=-1, keepdims=True)
    var = jnp.mean((x - mu) ** 2, axis=-1, keepdims=True)
    return (x - mu) * jax.lax.rsqrt(var + eps) * gamma + beta


def decoder_layer_kernel(
    x_ref,        # (S, D)        f32 — one batch element, full sequence
    wq_ref,       # (D, H*Dh)     bf16, 1/sqrt(d_head) folded in
    wk_ref,       # (D, H*Dh)     bf16
    wv_ref,       # (D, H*Dh)     bf16
    wo_ref,       # (H*Dh, D)     bf16
    ln1_g_ref,    # (1, D)        f32
    ln1_b_ref,    # (1, D)        f32
    w1_ref,       # (D, t_ff)     bf16  — streamed chunk of W1^T
    b1_ref,       # (1, t_ff)     f32   — streamed chunk of b1
    w2_ref,       # (t_ff, D)     bf16  — streamed chunk of W2^T
    b2_ref,       # (1, D)        f32
    ln2_g_ref,    # (1, D)        f32
    ln2_b_ref,    # (1, D)        f32
    o_ref,        # (tq, D)       f32
    y_sc,         # (tq, D)       f32 scratch — post-attention LayerNorm output
    ff_sc,        # (tq, D)       f32 scratch — FFN accumulator
    *,
    n_head, d_head, tq,
):
    f32, bf16 = jnp.float32, jnp.bfloat16
    qi = pl.program_id(1)          # q-tile index
    c = pl.program_id(2)           # FFN d_inner chunk index
    nc = pl.num_programs(2)
    S, D = x_ref.shape

    # ---------------- attention + first LayerNorm (only on the first FFN chunk) ----------------
    @pl.when(c == 0)
    def _attention():
        x_full_f32 = x_ref[...]                              # (S, D) f32
        x_full_bf = x_full_f32.astype(bf16)
        row0 = pl.multiple_of(qi * tq, tq)
        xq_f32 = x_ref[pl.ds(row0, tq), :]                   # (tq, D) f32 — this q tile
        xq_bf = xq_f32.astype(bf16)

        # Fused, MXU-wide projections; emit bf16 directly (f32 accumulation inside the MXU).
        q = jnp.dot(xq_bf, wq_ref[...], preferred_element_type=f32).astype(bf16)   # (tq, H*Dh)
        k = jnp.dot(x_full_bf, wk_ref[...], preferred_element_type=f32).astype(bf16)  # (S, H*Dh)
        v = jnp.dot(x_full_bf, wv_ref[...], preferred_element_type=f32).astype(bf16)  # (S, H*Dh)

        # Per-head attention; the head reduction of the output projection is MXU K-accumulation
        # into a single (tq, D) f32 accumulator (no (H,S,D) intermediate, no lane concatenate).
        attn_out = jnp.zeros((tq, D), f32)
        for h in range(n_head):                                # static unroll over heads
            sl = slice(h * d_head, (h + 1) * d_head)
            q_h, k_h, v_h = q[:, sl], k[:, sl], v[:, sl]
            # scores = q_h @ k_h^T  (scale already folded into Wq)
            s_h = jax.lax.dot_general(q_h, k_h, (((1,), (1,)), ((), ())),
                                      preferred_element_type=f32)       # (tq, S)
            s_h = s_h - jnp.max(s_h, axis=-1, keepdims=True)
            p_h = jnp.exp(s_h)                                           # unnormalized probs
            inv = pl.reciprocal(jnp.sum(p_h, axis=-1, keepdims=True), approx=True)  # (tq, 1)
            o_h = jnp.dot(p_h.astype(bf16), v_h, preferred_element_type=f32)        # (tq, Dh)
            o_h = (o_h * inv).astype(bf16)                    # deferred softmax normalization
            attn_out = attn_out + jnp.dot(o_h, wo_ref[sl, :], preferred_element_type=f32)

        y_sc[...] = _layer_norm(xq_f32 + attn_out, ln1_g_ref[...], ln1_b_ref[...])
        ff_sc[...] = jnp.zeros((tq, D), f32)

    # ---------------- position-wise FFN, streamed over d_inner chunks ----------------
    y_bf = y_sc[...].astype(bf16)
    h1 = jnp.dot(y_bf, w1_ref[...], preferred_element_type=f32) + b1_ref[...]
    h1 = jnp.maximum(h1, 0.0)
    ff_sc[...] = ff_sc[...] + jnp.dot(h1.astype(bf16), w2_ref[...], preferred_element_type=f32)

    @pl.when(c == nc - 1)
    def _finish():
        ff = ff_sc[...] + b2_ref[...]
        o_ref[...] = _layer_norm(y_sc[...] + ff, ln2_g_ref[...], ln2_b_ref[...]).astype(o_ref.dtype)


def _pick_tile(n, candidates):
    for cand in candidates:
        if cand <= n and n % cand == 0:
            return cand
    return n


def decoder_layer(dec_inp, kp, *, n_head, d_head):
    """dec_inp: (seq, batch, d_model) f32 — same layout as the PyTorch module."""
    S, B, D = dec_inp.shape
    hd = n_head * d_head
    d_inner = kp["w1"].shape[1]

    tq = _pick_tile(S, (256, 128))          # q-tile over the sequence (parallel grid axis)
    t_ff = _pick_tile(d_inner, (512, 256, 128))  # streamed FFN chunk (arbitrary grid axis)
    nq, nc = S // tq, d_inner // t_ff

    # TODO(synk): the (seq,batch)->(batch,seq) transpose stays host-side; at production sizes
    # feed batch-major activations to avoid the extra HBM round trip.
    x = jnp.transpose(dec_inp, (1, 0, 2))                                # (B, S, D) f32

    operands = (
        x, kp["wq"], kp["wk"], kp["wv"], kp["wo"],
        kp["ln1_g"], kp["ln1_b"], kp["w1"], kp["b1"], kp["w2"], kp["b2"],
        kp["ln2_g"], kp["ln2_b"],
    )

    # ---- VMEM budget from actual residency, capped by the chip's physical VMEM ----
    nbytes = lambda a: int(a.size) * a.dtype.itemsize
    const_bytes = sum(nbytes(kp[k]) for k in
                      ("wq", "wk", "wv", "wo", "ln1_g", "ln1_b", "b2", "ln2_g", "ln2_b"))
    ff_chunk_bytes = (D * t_ff + t_ff * D) * 2 + t_ff * 4               # W1/W2 chunk bf16 + b1 f32
    io_block_bytes = S * D * 4 + tq * D * 4                              # x block + out block
    scratch_bytes = 2 * tq * D * 4
    interm_bytes = ((tq + 2 * S) * hd * 2                                # q/k/v bf16 slabs
                    + tq * S * 4                                          # per-head scores f32
                    + 3 * tq * max(t_ff, D) * 4)                          # FFN h1 + headroom
    resident = (2 * (const_bytes + ff_chunk_bytes + io_block_bytes)       # double-buffered blocks
                + scratch_bytes + interm_bytes)
    try:
        vmem_cap = int(getattr(pltpu.get_tpu_info(), "vmem_capacity_bytes", 64 * 2**20))
    except Exception:
        vmem_cap = 64 * 2**20
    vmem_limit = int(min(int(0.9 * vmem_cap), max(32 * 2**20, 2 * resident)))

    c_w = lambda b, qi, c: (0, 0)                                         # constant weight blocks
    kernel = functools.partial(decoder_layer_kernel, n_head=n_head, d_head=d_head, tq=tq)

    out = pl.pallas_call(
        kernel,
        out_shape=jax.ShapeDtypeStruct((B, S, D), jnp.float32),
        grid_spec=pltpu.PrefetchScalarGridSpec(
            num_scalar_prefetch=0,
            grid=(B, nq, nc),
            in_specs=[
                pl.BlockSpec((None, S, D), lambda b, qi, c: (b, 0, 0)),   # x (full seq, one batch)
                pl.BlockSpec((D, hd), c_w),                               # Wq (scale folded)
                pl.BlockSpec((D, hd), c_w),                               # Wk
                pl.BlockSpec((D, hd), c_w),                               # Wv
                pl.BlockSpec((hd, D), c_w),                               # Wo
                pl.BlockSpec((1, D), c_w),                                # LN1 gamma
                pl.BlockSpec((1, D), c_w),                                # LN1 beta
                pl.BlockSpec((D, t_ff), lambda b, qi, c: (0, c)),         # W1^T chunk (streamed)
                pl.BlockSpec((1, t_ff), lambda b, qi, c: (0, c)),         # b1 chunk
                pl.BlockSpec((t_ff, D), lambda b, qi, c: (c, 0)),         # W2^T chunk (streamed)
                pl.BlockSpec((1, D), c_w),                                # b2
                pl.BlockSpec((1, D), c_w),                                # LN2 gamma
                pl.BlockSpec((1, D), c_w),                                # LN2 beta
            ],
            out_specs=pl.BlockSpec((None, tq, D), lambda b, qi, c: (b, qi, 0)),
            scratch_shapes=[pltpu.VMEM((tq, D), jnp.float32),             # y (post LN1)
                            pltpu.VMEM((tq, D), jnp.float32)],            # FFN accumulator
        ),
        compiler_params=pltpu.CompilerParams(
            dimension_semantics=("parallel", "parallel", "arbitrary"),
            vmem_limit_bytes=vmem_limit,
        ),
    )(*operands)
    return jnp.transpose(out, (1, 0, 2))                                  # (seq, batch, d_model)


# ----------------------------- parameters & reference -----------------------------

def init_params(key, *, n_head, d_model, d_head, d_inner):
    """Parameters in PyTorch layout (Linear.weight is (out_features, in_features))."""
    hd = n_head * d_head
    ks = jax.random.split(key, 6)
    s = 0.05
    return {
        "q_w": jax.random.normal(ks[0], (hd, d_model), jnp.float32) * s,
        "kv_w": jax.random.normal(ks[1], (2 * hd, d_model), jnp.float32) * s,
        "o_w": jax.random.normal(ks[2], (d_model, hd), jnp.float32) * s,
        "ln1_g": jnp.ones((d_model,), jnp.float32),
        "ln1_b": jnp.zeros((d_model,), jnp.float32),
        "ff1_w": jax.random.normal(ks[3], (d_inner, d_model), jnp.float32) * s,
        "ff1_b": jax.random.normal(ks[4], (d_inner,), jnp.float32) * s,
        "ff2_w": jax.random.normal(ks[5], (d_model, d_inner), jnp.float32) * s,
        "ff2_b": jnp.zeros((d_model,), jnp.float32),
        "ln2_g": jnp.ones((d_model,), jnp.float32),
        "ln2_b": jnp.zeros((d_model,), jnp.float32),
    }


def prepare_kernel_params(pt, *, n_head, d_head):
    """Convert PyTorch-layout params to the kernel layout (fused slabs, bf16 matmul weights)."""
    hd = n_head * d_head
    bf = jnp.bfloat16
    scale = 1.0 / math.sqrt(d_head)
    k_w, v_w = pt["kv_w"][:hd], pt["kv_w"][hd:]
    return {
        "wq": (pt["q_w"].T * scale).astype(bf),          # (D, H*Dh), attention scale folded in
        "wk": k_w.T.astype(bf),                          # (D, H*Dh)
        "wv": v_w.T.astype(bf),                          # (D, H*Dh)
        "wo": pt["o_w"].T.astype(bf),                    # (H*Dh, D)
        "ln1_g": pt["ln1_g"][None, :], "ln1_b": pt["ln1_b"][None, :],
        "w1": pt["ff1_w"].T.astype(bf), "b1": pt["ff1_b"][None, :],
        "w2": pt["ff2_w"].T.astype(bf), "b2": pt["ff2_b"][None, :],
        "ln2_g": pt["ln2_g"][None, :], "ln2_b": pt["ln2_b"][None, :],
    }


def _mm(x, w):
    """x @ w.T with bf16 operands and f32 accumulation (mirrors the kernel's MXU usage)."""
    return jnp.einsum("...d,od->...o", x.astype(jnp.bfloat16), w.astype(jnp.bfloat16),
                      preferred_element_type=jnp.float32)


def decoder_layer_ref(dec_inp, pt, *, n_head, d_head):
    """Pure-JAX reference mirroring the PyTorch forward (eval mode, post-lnorm)."""
    S, B, D = dec_inp.shape
    hd = n_head * d_head
    bf16, f32 = jnp.bfloat16, jnp.float32
    scale = 1.0 / math.sqrt(d_head)

    h = dec_inp                                       # f32 residual path, like the module
    q = _mm(h, pt["q_w"])                             # (S, B, HD)
    kv = _mm(h, pt["kv_w"])                           # (S, B, 2*HD)
    k, v = kv[..., :hd], kv[..., hd:]
    qh = q.reshape(S, B, n_head, d_head)
    kh = k.reshape(S, B, n_head, d_head)
    vh = v.reshape(S, B, n_head, d_head)
    score = jnp.einsum("ibnd,jbnd->ijbn", qh.astype(bf16), kh.astype(bf16),
                       preferred_element_type=f32) * scale
    prob = jax.nn.softmax(score, axis=1)
    vec = jnp.einsum("ijbn,jbnd->ibnd", prob.astype(bf16), vh.astype(bf16),
                     preferred_element_type=f32).reshape(S, B, hd)
    attn_out = _mm(vec, pt["o_w"])
    y = _layer_norm(h + attn_out, pt["ln1_g"], pt["ln1_b"])
    h1 = jnp.maximum(_mm(y, pt["ff1_w"]) + pt["ff1_b"], 0.0)
    ff = _mm(h1, pt["ff2_w"]) + pt["ff2_b"]
    return _layer_norm(y + ff, pt["ln2_g"], pt["ln2_b"])


if __name__ == "__main__":
    n_head, d_model, d_head, d_inner = 2, 32, 8, 64
    seq, batch = 8, 2

    key = jax.random.PRNGKey(0)
    k_x, k_p = jax.random.split(key)
    dec_inp = jax.random.normal(k_x, (seq, batch, d_model), jnp.float32)  # (seq, batch, d_model)
    params = init_params(k_p, n_head=n_head, d_model=d_model, d_head=d_head, d_inner=d_inner)
    kparams = prepare_kernel_params(params, n_head=n_head, d_head=d_head)

    out = decoder_layer(dec_inp, kparams, n_head=n_head, d_head=d_head)
    out = jax.block_until_ready(out)

    ref = decoder_layer_ref(dec_inp, params, n_head=n_head, d_head=d_head)
    assert out.shape == (seq, batch, d_model)
    err = float(jnp.max(jnp.abs(out - ref)))
    assert err < 2e-2, f"max abs err {err}"

    print("KERNEL_OK")
</pallas_src>

<mosaic_0001>
module attributes {stable_mosaic.version = 11 : i64} {
  func.func @decoder_layer_kernel(%arg0: i32, %arg1: i32, %arg2: i32, %arg3: memref<1x8x32xf32, #tpu.memory_space<vmem>>, %arg4: memref<32x16xbf16, #tpu.memory_space<vmem>>, %arg5: memref<32x16xbf16, #tpu.memory_space<vmem>>, %arg6: memref<32x16xbf16, #tpu.memory_space<vmem>>, %arg7: memref<16x32xbf16, #tpu.memory_space<vmem>>, %arg8: memref<1x32xf32, #tpu.memory_space<vmem>>, %arg9: memref<1x32xf32, #tpu.memory_space<vmem>>, %arg10: memref<32x64xbf16, #tpu.memory_space<vmem>>, %arg11: memref<1x64xf32, #tpu.memory_space<vmem>>, %arg12: memref<64x32xbf16, #tpu.memory_space<vmem>>, %arg13: memref<1x32xf32, #tpu.memory_space<vmem>>, %arg14: memref<1x32xf32, #tpu.memory_space<vmem>>, %arg15: memref<1x32xf32, #tpu.memory_space<vmem>>, %arg16: memref<1x8x32xf32, #tpu.memory_space<vmem>>, %arg17: memref<8x32xf32, #tpu.memory_space<vmem>>, %arg18: memref<8x32xf32, #tpu.memory_space<vmem>>) attributes {dimension_semantics = [#tpu.dimension_semantics<parallel>, #tpu.dimension_semantics<parallel>, #tpu.dimension_semantics<arbitrary>], iteration_bounds = array<i64: 2, 1, 1>, scalar_prefetch = 0 : i64, scratch_operands = 2 : i64, tpu.core_type = #tpu.core_type<tc>, window_params = [{transform_indices = @transform_0, window_bounds = array<i64: 1, 8, 32>}, {pipeline_mode = #tpu.pipeline_mode<synchronous>, transform_indices = @transform_1, window_bounds = array<i64: 32, 16>}, {pipeline_mode = #tpu.pipeline_mode<synchronous>, transform_indices = @transform_2, window_bounds = array<i64: 32, 16>}, {pipeline_mode = #tpu.pipeline_mode<synchronous>, transform_indices = @transform_3, window_bounds = array<i64: 32, 16>}, {pipeline_mode = #tpu.pipeline_mode<synchronous>, transform_indices = @transform_4, window_bounds = array<i64: 16, 32>}, {pipeline_mode = #tpu.pipeline_mode<synchronous>, transform_indices = @transform_5, window_bounds = array<i64: 1, 32>}, {pipeline_mode = #tpu.pipeline_mode<synchronous>, transform_indices = @transform_6, window_bounds = array<i64: 1, 32>}, {transform_indices = @transform_7, window_bounds = array<i64: 32, 64>}, {transform_indices = @transform_8, window_bounds = array<i64: 1, 64>}, {transform_indices = @transform_9, window_bounds = array<i64: 64, 32>}, {pipeline_mode = #tpu.pipeline_mode<synchronous>, transform_indices = @transform_10, window_bounds = array<i64: 1, 32>}, {pipeline_mode = #tpu.pipeline_mode<synchronous>, transform_indices = @transform_11, window_bounds = array<i64: 1, 32>}, {pipeline_mode = #tpu.pipeline_mode<synchronous>, transform_indices = @transform_12, window_bounds = array<i64: 1, 32>}, {transform_indices = @transform_13, window_bounds = array<i64: 1, 8, 32>}]} {
    %c0_i32 = arith.constant 0 : i32
    %0 = arith.cmpi eq, %arg2, %c0_i32 : i32
    %1 = arith.extui %0 : i1 to i32
    %c0_i32_0 = arith.constant 0 : i32
    %2 = arith.cmpi ne, %1, %c0_i32_0 : i32
    scf.if %2 {
      %c0_16 = arith.constant 0 : index
      %c0_17 = arith.constant 0 : index
      %c0_18 = arith.constant 0 : index
      %21 = vector.load %arg3[%c0_16, %c0_17, %c0_18] : memref<1x8x32xf32, #tpu.memory_space<vmem>>, vector<1x8x32xf32>
      %22 = vector.shape_cast %21 : vector<1x8x32xf32> to vector<8x32xf32>
      %23 = arith.truncf %22 : vector<8x32xf32> to vector<8x32xbf16>
      %c8_i32 = arith.constant 8 : i32
      %24 = arith.muli %arg1, %c8_i32 : i32
      %25 = tpu.assume_multiple %24, 8 : i32
      %c0_19 = arith.constant 0 : index
      %26 = arith.index_cast %25 : i32 to index
      %c0_20 = arith.constant 0 : index
      %27 = vector.load %arg3[%c0_19, %26, %c0_20] : memref<1x8x32xf32, #tpu.memory_space<vmem>>, vector<1x8x32xf32>
      %28 = vector.shape_cast %27 : vector<1x8x32xf32> to vector<8x32xf32>
      %29 = arith.truncf %28 : vector<8x32xf32> to vector<8x32xbf16>
      %c0_21 = arith.constant 0 : index
      %c0_22 = arith.constant 0 : index
      %30 = vector.load %arg4[%c0_21, %c0_22] : memref<32x16xbf16, #tpu.memory_space<vmem>>, vector<32x16xbf16>
      %cst_23 = arith.constant dense<0.000000e+00> : vector<8x16xf32>
      %31 = tpu.matmul %29, %30, %cst_23 {dimension_numbers = #tpu.dot_dimension_numbers<[1], [0], [0], [1], [0, 0, 1, 1], [], []>} : vector<8x32xbf16>, vector<32x16xbf16>, vector<8x16xf32> -> vector<8x16xf32>
      %32 = arith.truncf %31 : vector<8x16xf32> to vector<8x16xbf16>
      %c0_24 = arith.constant 0 : index
      %c0_25 = arith.constant 0 : index
      %33 = vector.load %arg5[%c0_24, %c0_25] : memref<32x16xbf16, #tpu.memory_space<vmem>>, vector<32x16xbf16>
      %cst_26 = arith.constant dense<0.000000e+00> : vector<8x16xf32>
      %34 = tpu.matmul %23, %33, %cst_26 {dimension_numbers = #tpu.dot_dimension_numbers<[1], [0], [0], [1], [0, 0, 1, 1], [], []>} : vector<8x32xbf16>, vector<32x16xbf16>, vector<8x16xf32> -> vector<8x16xf32>
      %35 = arith.truncf %34 : vector<8x16xf32> to vector<8x16xbf16>
      %c0_27 = arith.constant 0 : index
      %c0_28 = arith.constant 0 : index
      %36 = vector.load %arg6[%c0_27, %c0_28] : memref<32x16xbf16, #tpu.memory_space<vmem>>, vector<32x16xbf16>
      %cst_29 = arith.constant dense<0.000000e+00> : vector<8x16xf32>
      %37 = tpu.matmul %23, %36, %cst_29 {dimension_numbers = #tpu.dot_dimension_numbers<[1], [0], [0], [1], [0, 0, 1, 1], [], []>} : vector<8x32xbf16>, vector<32x16xbf16>, vector<8x16xf32> -> vector<8x16xf32>
      %38 = arith.truncf %37 : vector<8x16xf32> to vector<8x16xbf16>
      %cst_30 = arith.constant 0.000000e+00 : f32
      %39 = vector.broadcast %cst_30 : f32 to vector<8x32xf32>
      %40 = vector.extract_strided_slice %32 {offsets = [0, 0], sizes = [8, 8], strides = [1, 1]} : vector<8x16xbf16> to vector<8x8xbf16>
      %41 = vector.extract_strided_slice %35 {offsets = [0, 0], sizes = [8, 8], strides = [1, 1]} : vector<8x16xbf16> to vector<8x8xbf16>
      %42 = vector.extract_strided_slice %38 {offsets = [0, 0], sizes = [8, 8], strides = [1, 1]} : vector<8x16xbf16> to vector<8x8xbf16>
      %cst_31 = arith.constant dense<0.000000e+00> : vector<8x8xf32>
      %43 = tpu.matmul %40, %41, %cst_31 {dimension_numbers = #tpu.dot_dimension_numbers<[1], [1], [0], [0], [0, 0, 1, 0], [], []>} : vector<8x8xbf16>, vector<8x8xbf16>, vector<8x8xf32> -> vector<8x8xf32>
      %cst_32 = arith.constant dense<0xFF800000> : vector<8xf32>
      %44 = vector.multi_reduction <maximumf>, %43, %cst_32 [1] : vector<8x8xf32> to vector<8xf32>
      %45 = vector.shape_cast %44 : vector<8xf32> to vector<8x1xf32>
      %46 = vector.broadcast %45 : vector<8x1xf32> to vector<8x8xf32>
      %47 = arith.subf %43, %46 : vector<8x8xf32>
      %48 = math.exp %47 : vector<8x8xf32>
      %cst_33 = arith.constant dense<0.000000e+00> : vector<8xf32>
      %49 = vector.multi_reduction <add>, %48, %cst_33 [1] : vector<8x8xf32> to vector<8xf32>
      %50 = vector.shape_cast %49 : vector<8xf32> to vector<8x1xf32>
      %51 = tpu.reciprocal %50 {approx = true} : vector<8x1xf32> -> vector<8x1xf32>
      %52 = arith.truncf %48 : vector<8x8xf32> to vector<8x8xbf16>
      %cst_34 = arith.constant dense<0.000000e+00> : vector<8x8xf32>
      %53 = tpu.matmul %52, %42, %cst_34 {dimension_numbers = #tpu.dot_dimension_numbers<[1], [0], [0], [1], [0, 0, 1, 1], [], []>} : vector<8x8xbf16>, vector<8x8xbf16>, vector<8x8xf32> -> vector<8x8xf32>
      %54 = vector.broadcast %51 : vector<8x1xf32> to vector<8x8xf32>
      %55 = arith.mulf %53, %54 : vector<8x8xf32>
      %56 = arith.truncf %55 : vector<8x8xf32> to vector<8x8xbf16>
      %c0_35 = arith.constant 0 : index
      %c0_36 = arith.constant 0 : index
      %57 = vector.load %arg7[%c0_35, %c0_36] : memref<16x32xbf16, #tpu.memory_space<vmem>>, vector<8x32xbf16>
      %cst_37 = arith.constant dense<0.000000e+00> : vector<8x32xf32>
      %58 = tpu.matmul %56, %57, %cst_37 {dimension_numbers = #tpu.dot_dimension_numbers<[1], [0], [0], [1], [0, 0, 1, 1], [], []>} : vector<8x8xbf16>, vector<8x32xbf16>, vector<8x32xf32> -> vector<8x32xf32>
      %59 = arith.addf %39, %58 : vector<8x32xf32>
      %60 = vector.extract_strided_slice %32 {offsets = [0, 8], sizes = [8, 8], strides = [1, 1]} : vector<8x16xbf16> to vector<8x8xbf16>
      %61 = vector.extract_strided_slice %35 {offsets = [0, 8], sizes = [8, 8], strides = [1, 1]} : vector<8x16xbf16> to vector<8x8xbf16>
      %62 = vector.extract_strided_slice %38 {offsets = [0, 8], sizes = [8, 8], strides = [1, 1]} : vector<8x16xbf16> to vector<8x8xbf16>
      %cst_38 = arith.constant dense<0.000000e+00> : vector<8x8xf32>
      %63 = tpu.matmul %60, %61, %cst_38 {dimension_numbers = #tpu.dot_dimension_numbers<[1], [1], [0], [0], [0, 0, 1, 0], [], []>} : vector<8x8xbf16>, vector<8x8xbf16>, vector<8x8xf32> -> vector<8x8xf32>
      %cst_39 = arith.constant dense<0xFF800000> : vector<8xf32>
      %64 = vector.multi_reduction <maximumf>, %63, %cst_39 [1] : vector<8x8xf32> to vector<8xf32>
      %65 = vector.shape_cast %64 : vector<8xf32> to vector<8x1xf32>
      %66 = vector.broadcast %65 : vector<8x1xf32> to vector<8x8xf32>
      %67 = arith.subf %63, %66 : vector<8x8xf32>
      %68 = math.exp %67 : vector<8x8xf32>
      %cst_40 = arith.constant dense<0.000000e+00> : vector<8xf32>
      %69 = vector.multi_reduction <add>, %68, %cst_40 [1] : vector<8x8xf32> to vector<8xf32>
      %70 = vector.shape_cast %69 : vector<8xf32> to vector<8x1xf32>
      %71 = tpu.reciprocal %70 {approx = true} : vector<8x1xf32> -> vector<8x1xf32>
      %72 = arith.truncf %68 : vector<8x8xf32> to vector<8x8xbf16>
      %cst_41 = arith.constant dense<0.000000e+00> : vector<8x8xf32>
      %73 = tpu.matmul %72, %62, %cst_41 {dimension_numbers = #tpu.dot_dimension_numbers<[1], [0], [0], [1], [0, 0, 1, 1], [], []>} : vector<8x8xbf16>, vector<8x8xbf16>, vector<8x8xf32> -> vector<8x8xf32>
      %74 = vector.broadcast %71 : vector<8x1xf32> to vector<8x8xf32>
      %75 = arith.mulf %73, %74 : vector<8x8xf32>
      %76 = arith.truncf %75 : vector<8x8xf32> to vector<8x8xbf16>
      %c8 = arith.constant 8 : index
      %c0_42 = arith.constant 0 : index
      %77 = vector.load %arg7[%c8, %c0_42] : memref<16x32xbf16, #tpu.memory_space<vmem>>, vector<8x32xbf16>
      %cst_43 = arith.constant dense<0.000000e+00> : vector<8x32xf32>
      %78 = tpu.matmul %76, %77, %cst_43 {dimension_numbers = #tpu.dot_dimension_numbers<[1], [0], [0], [1], [0, 0, 1, 1], [], []>} : vector<8x8xbf16>, vector<8x32xbf16>, vector<8x32xf32> -> vector<8x32xf32>
      %79 = arith.addf %59, %78 : vector<8x32xf32>
      %80 = arith.addf %28, %79 : vector<8x32xf32>
      %c0_44 = arith.constant 0 : index
      %c0_45 = arith.constant 0 : index
      %81 = vector.load %arg8[%c0_44, %c0_45] : memref<1x32xf32, #tpu.memory_space<vmem>>, vector<1x32xf32>
      %c0_46 = arith.constant 0 : index
      %c0_47 = arith.constant 0 : index
      %82 = vector.load %arg9[%c0_46, %c0_47] : memref<1x32xf32, #tpu.memory_space<vmem>>, vector<1x32xf32>
      %cst_48 = arith.constant dense<0.000000e+00> : vector<8xf32>
      %83 = vector.multi_reduction <add>, %80, %cst_48 [1] : vector<8x32xf32> to vector<8xf32>
      %84 = vector.shape_cast %83 : vector<8xf32> to vector<8x1xf32>
      %cst_49 = arith.constant 3.200000e+01 : f32
      %85 = vector.broadcast %cst_49 : f32 to vector<8x1xf32>
      %86 = arith.divf %84, %85 : vector<8x1xf32>
      %87 = vector.broadcast %86 : vector<8x1xf32> to vector<8x32xf32>
      %88 = arith.subf %80, %87 : vector<8x32xf32>
      %89 = arith.mulf %88, %88 : vector<8x32xf32>
      %cst_50 = arith.constant dense<0.000000e+00> : vector<8xf32>
      %90 = vector.multi_reduction <add>, %89, %cst_50 [1] : vector<8x32xf32> to vector<8xf32>
      %91 = vector.shape_cast %90 : vector<8xf32> to vector<8x1xf32>
      %cst_51 = arith.constant 3.200000e+01 : f32
      %92 = vector.broadcast %cst_51 : f32 to vector<8x1xf32>
      %93 = arith.divf %91, %92 : vector<8x1xf32>
      %94 = vector.broadcast %86 : vector<8x1xf32> to vector<8x32xf32>
      %95 = arith.subf %80, %94 : vector<8x32xf32>
      %cst_52 = arith.constant 9.99999974E-6 : f32
      %96 = vector.broadcast %cst_52 : f32 to vector<8x1xf32>
      %97 = arith.addf %93, %96 : vector<8x1xf32>
      %98 = math.rsqrt %97 : vector<8x1xf32>
      %99 = vector.broadcast %98 : vector<8x1xf32> to vector<8x32xf32>
      %100 = arith.mulf %95, %99 : vector<8x32xf32>
      %101 = vector.broadcast %81 : vector<1x32xf32> to vector<8x32xf32>
      %102 = arith.mulf %100, %101 : vector<8x32xf32>
      %103 = vector.broadcast %82 : vector<1x32xf32> to vector<8x32xf32>
      %104 = arith.addf %102, %103 : vector<8x32xf32>
      %c0_53 = arith.constant 0 : index
      %c0_54 = arith.constant 0 : index
      %105 = vector.load %arg17[%c0_53, %c0_54] : memref<8x32xf32, #tpu.memory_space<vmem>>, vector<8x32xf32>
      tpu.vector_store %arg17[%c0_53, %c0_54], %104 {strides = array<i32>} : memref<8x32xf32, #tpu.memory_space<vmem>>, vector<8x32xf32>,
      %cst_55 = arith.constant 0.000000e+00 : f32
      %106 = vector.broadcast %cst_55 : f32 to vector<8x32xf32>
      %c0_56 = arith.constant 0 : index
      %c0_57 = arith.constant 0 : index
      %107 = vector.load %arg18[%c0_56, %c0_57] : memref<8x32xf32, #tpu.memory_space<vmem>>, vector<8x32xf32>
      tpu.vector_store %arg18[%c0_56, %c0_57], %106 {strides = array<i32>} : memref<8x32xf32, #tpu.memory_space<vmem>>, vector<8x32xf32>,
    } else {
    }
    %c0 = arith.constant 0 : index
    %c0_1 = arith.constant 0 : index
    %3 = vector.load %arg17[%c0, %c0_1] : memref<8x32xf32, #tpu.memory_space<vmem>>, vector<8x32xf32>
    %4 = arith.truncf %3 : vector<8x32xf32> to vector<8x32xbf16>
    %c0_2 = arith.constant 0 : index
    %c0_3 = arith.constant 0 : index
    %5 = vector.load %arg10[%c0_2, %c0_3] : memref<32x64xbf16, #tpu.memory_space<vmem>>, vector<32x64xbf16>
    %cst = arith.constant dense<0.000000e+00> : vector<8x64xf32>
    %6 = tpu.matmul %4, %5, %cst {dimension_numbers = #tpu.dot_dimension_numbers<[1], [0], [0], [1], [0, 0, 1, 1], [], []>} : vector<8x32xbf16>, vector<32x64xbf16>, vector<8x64xf32> -> vector<8x64xf32>
    %c0_4 = arith.constant 0 : index
    %c0_5 = arith.constant 0 : index
    %7 = vector.load %arg11[%c0_4, %c0_5] : memref<1x64xf32, #tpu.memory_space<vmem>>, vector<1x64xf32>
    %8 = vector.broadcast %7 : vector<1x64xf32> to vector<8x64xf32>
    %9 = arith.addf %6, %8 : vector<8x64xf32>
    %cst_6 = arith.constant 0.000000e+00 : f32
    %10 = vector.broadcast %cst_6 : f32 to vector<8x64xf32>
    %11 = arith.maximumf %9, %10 : vector<8x64xf32>
    %c0_7 = arith.constant 0 : index
    %c0_8 = arith.constant 0 : index
    %12 = vector.load %arg18[%c0_7, %c0_8] : memref<8x32xf32, #tpu.memory_space<vmem>>, vector<8x32xf32>
    %13 = arith.truncf %11 : vector<8x64xf32> to vector<8x64xbf16>
    %c0_9 = arith.constant 0 : index
    %c0_10 = arith.constant 0 : index
    %14 = vector.load %arg12[%c0_9, %c0_10] : memref<64x32xbf16, #tpu.memory_space<vmem>>, vector<64x32xbf16>
    %cst_11 = arith.constant dense<0.000000e+00> : vector<8x32xf32>
    %15 = tpu.matmul %13, %14, %cst_11 {dimension_numbers = #tpu.dot_dimension_numbers<[1], [0], [0], [1], [0, 0, 1, 1], [], []>} : vector<8x64xbf16>, vector<64x32xbf16>, vector<8x32xf32> -> vector<8x32xf32>
    %16 = arith.addf %12, %15 : vector<8x32xf32>
    %c0_12 = arith.constant 0 : index
    %c0_13 = arith.constant 0 : index
    %17 = vector.load %arg18[%c0_12, %c0_13] : memref<8x32xf32, #tpu.memory_space<vmem>>, vector<8x32xf32>
    tpu.vector_store %arg18[%c0_12, %c0_13], %16 {strides = array<i32>} : memref<8x32xf32, #tpu.memory_space<vmem>>, vector<8x32xf32>,
    %c0_i32_14 = arith.constant 0 : i32
    %18 = arith.cmpi eq, %arg2, %c0_i32_14 : i32
    %19 = arith.extui %18 : i1 to i32
    %c0_i32_15 = arith.constant 0 : i32
    %20 = arith.cmpi ne, %19, %c0_i32_15 : i32
    scf.if %20 {
      %c0_16 = arith.constant 0 : index
      %c0_17 = arith.constant 0 : index
      %21 = vector.load %arg18[%c0_16, %c0_17] : memref<8x32xf32, #tpu.memory_space<vmem>>, vector<8x32xf32>
      %c0_18 = arith.constant 0 : index
      %c0_19 = arith.constant 0 : index
      %22 = vector.load %arg13[%c0_18, %c0_19] : memref<1x32xf32, #tpu.memory_space<vmem>>, vector<1x32xf32>
      %23 = vector.broadcast %22 : vector<1x32xf32> to vector<8x32xf32>
      %24 = arith.addf %21, %23 : vector<8x32xf32>
      %c0_20 = arith.constant 0 : index
      %c0_21 = arith.constant 0 : index
      %25 = vector.load %arg17[%c0_20, %c0_21] : memref<8x32xf32, #tpu.memory_space<vmem>>, vector<8x32xf32>
      %26 = arith.addf %25, %24 : vector<8x32xf32>
      %c0_22 = arith.constant 0 : index
      %c0_23 = arith.constant 0 : index
      %27 = vector.load %arg14[%c0_22, %c0_23] : memref<1x32xf32, #tpu.memory_space<vmem>>, vector<1x32xf32>
      %c0_24 = arith.constant 0 : index
      %c0_25 = arith.constant 0 : index
      %28 = vector.load %arg15[%c0_24, %c0_25] : memref<1x32xf32, #tpu.memory_space<vmem>>, vector<1x32xf32>
      %cst_26 = arith.constant dense<0.000000e+00> : vector<8xf32>
      %29 = vector.multi_reduction <add>, %26, %cst_26 [1] : vector<8x32xf32> to vector<8xf32>
      %30 = vector.shape_cast %29 : vector<8xf32> to vector<8x1xf32>
      %cst_27 = arith.constant 3.200000e+01 : f32
      %31 = vector.broadcast %cst_27 : f32 to vector<8x1xf32>
      %32 = arith.divf %30, %31 : vector<8x1xf32>
      %33 = vector.broadcast %32 : vector<8x1xf32> to vector<8x32xf32>
      %34 = arith.subf %26, %33 : vector<8x32xf32>
      %35 = arith.mulf %34, %34 : vector<8x32xf32>
      %cst_28 = arith.constant dense<0.000000e+00> : vector<8xf32>
      %36 = vector.multi_reduction <add>, %35, %cst_28 [1] : vector<8x32xf32> to vector<8xf32>
      %37 = vector.shape_cast %36 : vector<8xf32> to vector<8x1xf32>
      %cst_29 = arith.constant 3.200000e+01 : f32
      %38 = vector.broadcast %cst_29 : f32 to vector<8x1xf32>
      %39 = arith.divf %37, %38 : vector<8x1xf32>
      %40 = vector.broadcast %32 : vector<8x1xf32> to vector<8x32xf32>
      %41 = arith.subf %26, %40 : vector<8x32xf32>
      %cst_30 = arith.constant 9.99999974E-6 : f32
      %42 = vector.broadcast %cst_30 : f32 to vector<8x1xf32>
      %43 = arith.addf %39, %42 : vector<8x1xf32>
      %44 = math.rsqrt %43 : vector<8x1xf32>
      %45 = vector.broadcast %44 : vector<8x1xf32> to vector<8x32xf32>
      %46 = arith.mulf %41, %45 : vector<8x32xf32>
      %47 = vector.broadcast %27 : vector<1x32xf32> to vector<8x32xf32>
      %48 = arith.mulf %46, %47 : vector<8x32xf32>
      %49 = vector.broadcast %28 : vector<1x32xf32> to vector<8x32xf32>
      %50 = arith.addf %48, %49 : vector<8x32xf32>
      %c0_31 = arith.constant 0 : index
      %c0_32 = arith.constant 0 : index
      %c0_33 = arith.constant 0 : index
      %51 = vector.load %arg16[%c0_31, %c0_32, %c0_33] : memref<1x8x32xf32, #tpu.memory_space<vmem>>, vector<1x8x32xf32>
      %52 = vector.shape_cast %51 : vector<1x8x32xf32> to vector<8x32xf32>
      %53 = vector.shape_cast %50 : vector<8x32xf32> to vector<1x8x32xf32>
      tpu.vector_store %arg16[%c0_31, %c0_32, %c0_33], %53 {strides = array<i32>} : memref<1x8x32xf32, #tpu.memory_space<vmem>>, vector<1x8x32xf32>,
    } else {
    }
    return
  }
  func.func @transform_0(%arg0: i32, %arg1: i32, %arg2: i32) -> (i32, i32, i32) {
    %c0_i32 = arith.constant 0 : i32
    %c0_i32_0 = arith.constant 0 : i32
    %c0_i32_1 = arith.constant 0 : i32
    return %arg0, %c0_i32, %c0_i32_0 : i32, i32, i32
  }
  func.func @transform_1(%arg0: i32, %arg1: i32, %arg2: i32) -> (i32, i32) {
    %c0_i32 = arith.constant 0 : i32
    %c0_i32_0 = arith.constant 0 : i32
    %c0_i32_1 = arith.constant 0 : i32
    return %c0_i32, %c0_i32_0 : i32, i32
  }
  func.func @transform_2(%arg0: i32, %arg1: i32, %arg2: i32) -> (i32, i32) {
    %c0_i32 = arith.constant 0 : i32
    %c0_i32_0 = arith.constant 0 : i32
    %c0_i32_1 = arith.constant 0 : i32
    return %c0_i32, %c0_i32_0 : i32, i32
  }
  func.func @transform_3(%arg0: i32, %arg1: i32, %arg2: i32) -> (i32, i32) {
    %c0_i32 = arith.constant 0 : i32
    %c0_i32_0 = arith.constant 0 : i32
    %c0_i32_1 = arith.constant 0 : i32
    return %c0_i32, %c0_i32_0 : i32, i32
  }
  func.func @transform_4(%arg0: i32, %arg1: i32, %arg2: i32) -> (i32, i32) {
    %c0_i32 = arith.constant 0 : i32
    %c0_i32_0 = arith.constant 0 : i32
    %c0_i32_1 = arith.constant 0 : i32
    return %c0_i32, %c0_i32_0 : i32, i32
  }
  func.func @transform_5(%arg0: i32, %arg1: i32, %arg2: i32) -> (i32, i32) {
    %c0_i32 = arith.constant 0 : i32
    %c0_i32_0 = arith.constant 0 : i32
    %c0_i32_1 = arith.constant 0 : i32
    return %c0_i32, %c0_i32_0 : i32, i32
  }
  func.func @transform_6(%arg0: i32, %arg1: i32, %arg2: i32) -> (i32, i32) {
    %c0_i32 = arith.constant 0 : i32
    %c0_i32_0 = arith.constant 0 : i32
    %c0_i32_1 = arith.constant 0 : i32
    return %c0_i32, %c0_i32_0 : i32, i32
  }
  func.func @transform_7(%arg0: i32, %arg1: i32, %arg2: i32) -> (i32, i32) {
    %c0_i32 = arith.constant 0 : i32
    %c0_i32_0 = arith.constant 0 : i32
    return %c0_i32, %arg2 : i32, i32
  }
  func.func @transform_8(%arg0: i32, %arg1: i32, %arg2: i32) -> (i32, i32) {
    %c0_i32 = arith.constant 0 : i32
    %c0_i32_0 = arith.constant 0 : i32
    return %c0_i32, %arg2 : i32, i32
  }
  func.func @transform_9(%arg0: i32, %arg1: i32, %arg2: i32) -> (i32, i32) {
    %c0_i32 = arith.constant 0 : i32
    %c0_i32_0 = arith.constant 0 : i32
    return %arg2, %c0_i32 : i32, i32
  }
  func.func @transform_10(%arg0: i32, %arg1: i32, %arg2: i32) -> (i32, i32) {
    %c0_i32 = arith.constant 0 : i32
    %c0_i32_0 = arith.constant 0 : i32
    %c0_i32_1 = arith.constant 0 : i32
    return %c0_i32, %c0_i32_0 : i32, i32
  }
  func.func @transform_11(%arg0: i32, %arg1: i32, %arg2: i32) -> (i32, i32) {
    %c0_i32 = arith.constant 0 : i32
    %c0_i32_0 = arith.constant 0 : i32
    %c0_i32_1 = arith.constant 0 : i32
    return %c0_i32, %c0_i32_0 : i32, i32
  }
  func.func @transform_12(%arg0: i32, %arg1: i32, %arg2: i32) -> (i32, i32) {
    %c0_i32 = arith.constant 0 : i32
    %c0_i32_0 = arith.constant 0 : i32
    %c0_i32_1 = arith.constant 0 : i32
    return %c0_i32, %c0_i32_0 : i32, i32
  }
  func.func @transform_13(%arg0: i32, %arg1: i32, %arg2: i32) -> (i32, i32, i32) {
    %c0_i32 = arith.constant 0 : i32
    %c0_i32_0 = arith.constant 0 : i32
    return %arg0, %arg1, %c0_i32 : i32, i32, i32
  }
}

</mosaic_0001>

<llo_original>
// kernel: tpu_custom_call.1
$region0: #{tpu_custom_call.1}
  #allocation0 [shape = 'u32[]', space=smem, size = 0x4, offset = 0x4, fixed_abs, tag = 'smem constant byte address 0x4 - core index']
  #allocation1 [shape = 'u32[144,128]{1,0:T(1,128)}', space=vmem, size = 0x12000, scoped, tag = 'internal scratch']
  #allocation2 [shape = 'f32[8,32]{1,0:T(8,128)}', space=vmem, size = 0x1000, scoped, tag = 'scratch operand']
  #allocation3 [shape = 'f32[8,32]{1,0:T(8,128)}', space=vmem, size = 0x1000, scoped, tag = 'scratch operand']
  %s0 = inlined_call_operand.vmem [shape: f32[2,8,32], index: 0, kind: input, shape index: {}]
  %s1 = inlined_call_operand.vmem [shape: bf16[32,16], index: 1, kind: input, shape index: {}]
  %s2 = inlined_call_operand.vmem [shape: bf16[32,16], index: 2, kind: input, shape index: {}]
  %s3 = inlined_call_operand.vmem [shape: bf16[32,16], index: 3, kind: input, shape index: {}]
  %s4 = inlined_call_operand.vmem [shape: bf16[16,32], index: 4, kind: input, shape index: {}]
  %s5 = inlined_call_operand.vmem [shape: f32[1,32], index: 5, kind: input, shape index: {}]
  %s6 = inlined_call_operand.vmem [shape: f32[1,32], index: 6, kind: input, shape index: {}]
  %s7 = inlined_call_operand.vmem [shape: bf16[32,64], index: 7, kind: input, shape index: {}]
  %s8 = inlined_call_operand.vmem [shape: f32[1,64], index: 8, kind: input, shape index: {}]
  %s9 = inlined_call_operand.vmem [shape: bf16[64,32], index: 9, kind: input, shape index: {}]
  %s10 = inlined_call_operand.vmem [shape: f32[1,32], index: 10, kind: input, shape index: {}]
  %s11 = inlined_call_operand.vmem [shape: f32[1,32], index: 11, kind: input, shape index: {}]
  %s12 = inlined_call_operand.vmem [shape: f32[1,32], index: 12, kind: input, shape index: {}]
  %s13 = inlined_call_operand.hbm [shape: f32[2,8,32], index: 13, kind: output, shape index: {}]
  %s14 = sld [smem:[#allocation0]]
  $region93: #{tpu_custom_call.1} parent=0
    _
  %s16 = ssub.s32 1, %s14
  %s17 = scalar_select 0, %s16, %s14
  $region1: #{tpu_custom_call.1} parent=0
    #allocation4 [shape = 'u8[8192]{0}', space=vmem, size = 0x2000, scoped, tag = 'output window, operand 0']
    #allocation5 [shape = 's32[2]{0}', space=sflag, size = 0x8, scoped, tag = 'scoped memory for tpu_custom_call.1']
    %18 = vsyncpa [#allocation5], 0
    %s19 = scalar_lea.sflag [#allocation5], 1
    %20 = vsyncpa %s19, 0
    loop: start=0, step=1, limit=4
    $region2: #{tpu_custom_call.1} parent=1 // loop_pre_header
      _
    $region3: #{tpu_custom_call.1} parent=1 // loop_header
      %s22 = sphi 0, %s26
      %p23 = scmp.ge.s32.totalorder %s22, 4
      %s29 = sphi 0, %s48
      %s30 = sphi 0, %s44
      %s31 = sphi 0, %s40
      %s32 = sphi 0, %s29
      %s33 = sphi 0, %s30
      %s34 = sphi 0, %s31
      %s35 = sphi 0, %s32
      %s36 = sphi 0, %s33
      %s37 = sphi 0, %s34
      %s51 = sphi 0, %s53
      %s54 = sphi 0, %s51
      %s55 = sphi 0, %s54
      %s71 = sphi 0, %s55
      %s75 = sphi 0, %s75
      %s77 = sphi 0, %s75
      %s78 = sphi 0, %s77
      %s92 = sphi 0, %s78
      %s96 = sphi 0, %s96
      %s98 = sphi 0, %s96
      %s99 = sphi 0, %s98
      %s113 = sphi 0, %s99
      %s117 = sphi 0, %s117
      %s119 = sphi 0, %s117
      %s120 = sphi 0, %s119
      %s134 = sphi 0, %s120
      %s138 = sphi 0, %s138
      %s140 = sphi 0, %s138
      %s141 = sphi 0, %s140
      %s155 = sphi 0, %s141
      %s159 = sphi 0, %s159
      %s161 = sphi 0, %s159
      %s162 = sphi 0, %s161
      %s176 = sphi 0, %s162
      %s180 = sphi 0, %s180
      %s182 = sphi 0, %s180
      %s183 = sphi 0, %s182
      %s197 = sphi 0, %s183
      %s203 = sphi 0, %s205
      %s206 = sphi 0, %s203
      %s207 = sphi 0, %s206
      %s223 = sphi 0, %s207
      %s229 = sphi 0, %s231
      %s232 = sphi 0, %s229
      %s233 = sphi 0, %s232
      %s249 = sphi 0, %s233
      %s255 = sphi 0, %s257
      %s258 = sphi 0, %s255
      %s259 = sphi 0, %s258
      %s275 = sphi 0, %s259
      %s279 = sphi 0, %s279
      %s281 = sphi 0, %s279
      %s282 = sphi 0, %s281
      %s296 = sphi 0, %s282
      %s300 = sphi 0, %s300
      %s302 = sphi 0, %s300
      %s303 = sphi 0, %s302
      %s317 = sphi 0, %s303
      %s321 = sphi 0, %s321
      %s323 = sphi 0, %s321
      %s324 = sphi 0, %s323
      %s338 = sphi 0, %s324
      %s346 = sphi 0, %s348
      %s349 = sphi 0, %s346
      %s350 = sphi 0, %s349
      %s366 = sphi 0, %s350
    $region4: #{tpu_custom_call.1} parent=1 // loop_header_branch
      %25 = sbr.rel (%p23) target = $region8
    $region5: #{tpu_custom_call.1} parent=1 // loop_body
      %s27 = ssub.s32 %s22, 1
      %s28 = ssub.s32 %s22, 2
      %s38 = sadd.s32 1, %s31
      %p39 = scmp.ge.s32.totalorder %s38, 1
      %s40 = scalar_select %p39, 0, %s38
      %s41 = sadd.s32 1, %s30
      %s42 = scalar_select %p39, %s41, %s30
      %p43 = scmp.ge.s32.totalorder %s42, 1
      %s44 = scalar_select %p43, 0, %s42
      %s45 = sadd.s32 1, %s29
      %s46 = scalar_select %p43, %s45, %s29
      %p47 = scmp.ge.s32.totalorder %s46, 2
      %s48 = scalar_select %p47, 0, %s46
      %s49 = ssub.s32 %s29, %s48
      %p50 = scmp.eq.s32.totalorder %s49, 0
      %s52 = sadd.s32 %s51, 1
      %s53 = scalar_select %p50, %s51, %s52
      %p56 = pneg %p50
      %p57 = scmp.eq.s32.totalorder %s22, 1
      %p58 = por %p56, %p57
      %p59 = scmp.ne.s32.totalorder %s51, %s54
      %p60 = scmp.eq.s32.totalorder %s22, 0
      %p61 = por %p59, %p60
      %p62 = scmp.ne.s32.totalorder %s51, %s54
      %p63 = scmp.eq.s32.totalorder %s27, 1
      %p64 = por %p62, %p63
      %p65 = scmp.ne.s32.totalorder %s54, %s55
      %p66 = scmp.eq.s32.totalorder %s27, 0
      %p67 = por %p65, %p66
      %p68 = scmp.ne.s32.totalorder %s54, %s55
      %p69 = scmp.eq.s32.totalorder %s28, 1
      %p70 = por %p68, %p69
      %p72 = scmp.ne.s32.totalorder %s55, %s71
      %p73 = scmp.eq.s32.totalorder %s28, 0
      %p74 = por %p72, %p73
      %s76 = sadd.s32 %s75, 1
      %p79 = scmp.eq.s32.totalorder %s22, 1
      %p80 = scmp.ne.s32.totalorder %s75, %s77
      %p81 = scmp.eq.s32.totalorder %s22, 0
      %p82 = por %p80, %p81
      %p83 = scmp.ne.s32.totalorder %s75, %s77
      %p84 = scmp.eq.s32.totalorder %s27, 1
      %p85 = por %p83, %p84
      %p86 = scmp.ne.s32.totalorder %s77, %s78
      %p87 = scmp.eq.s32.totalorder %s27, 0
      %p88 = por %p86, %p87
      %p89 = scmp.ne.s32.totalorder %s77, %s78
      %p90 = scmp.eq.s32.totalorder %s28, 1
      %p91 = por %p89, %p90
      %p93 = scmp.ne.s32.totalorder %s78, %s92
      %p94 = scmp.eq.s32.totalorder %s28, 0
      %p95 = por %p93, %p94
      %s97 = sadd.s32 %s96, 1
      %p100 = scmp.eq.s32.totalorder %s22, 1
      %p101 = scmp.ne.s32.totalorder %s96, %s98
      %p102 = scmp.eq.s32.totalorder %s22, 0
      %p103 = por %p101, %p102
      %p104 = scmp.ne.s32.totalorder %s96, %s98
      %p105 = scmp.eq.s32.totalorder %s27, 1
      %p106 = por %p104, %p105
      %p107 = scmp.ne.s32.totalorder %s98, %s99
      %p108 = scmp.eq.s32.totalorder %s27, 0
      %p109 = por %p107, %p108
      %p110 = scmp.ne.s32.totalorder %s98, %s99
      %p111 = scmp.eq.s32.totalorder %s28, 1
      %p112 = por %p110, %p111
      %p114 = scmp.ne.s32.totalorder %s99, %s113
      %p115 = scmp.eq.s32.totalorder %s28, 0
      %p116 = por %p114, %p115
      %s118 = sadd.s32 %s117, 1
      %p121 = scmp.eq.s32.totalorder %s22, 1
      %p122 = scmp.ne.s32.totalorder %s117, %s119
      %p123 = scmp.eq.s32.totalorder %s22, 0
      %p124 = por %p122, %p123
      %p125 = scmp.ne.s32.totalorder %s117, %s119
      %p126 = scmp.eq.s32.totalorder %s27, 1
      %p127 = por %p125, %p126
      %p128 = scmp.ne.s32.totalorder %s119, %s120
      %p129 = scmp.eq.s32.totalorder %s27, 0
      %p130 = por %p128, %p129
      %p131 = scmp.ne.s32.totalorder %s119, %s120
      %p132 = scmp.eq.s32.totalorder %s28, 1
      %p133 = por %p131, %p132
      %p135 = scmp.ne.s32.totalorder %s120, %s134
      %p136 = scmp.eq.s32.totalorder %s28, 0
      %p137 = por %p135, %p136
      %s139 = sadd.s32 %s138, 1
      %p142 = scmp.eq.s32.totalorder %s22, 1
      %p143 = scmp.ne.s32.totalorder %s138, %s140
      %p144 = scmp.eq.s32.totalorder %s22, 0
      %p145 = por %p143, %p144
      %p146 = scmp.ne.s32.totalorder %s138, %s140
      %p147 = scmp.eq.s32.totalorder %s27, 1
      %p148 = por %p146, %p147
      %p149 = scmp.ne.s32.totalorder %s140, %s141
      %p150 = scmp.eq.s32.totalorder %s27, 0
      %p151 = por %p149, %p150
      %p152 = scmp.ne.s32.totalorder %s140, %s141
      %p153 = scmp.eq.s32.totalorder %s28, 1
      %p154 = por %p152, %p153
      %p156 = scmp.ne.s32.totalorder %s141, %s155
      %p157 = scmp.eq.s32.totalorder %s28, 0
      %p158 = por %p156, %p157
      %s160 = sadd.s32 %s159, 1
      %p163 = scmp.eq.s32.totalorder %s22, 1
      %p164 = scmp.ne.s32.totalorder %s159, %s161
      %p165 = scmp.eq.s32.totalorder %s22, 0
      %p166 = por %p164, %p165
      %p167 = scmp.ne.s32.totalorder %s159, %s161
      %p168 = scmp.eq.s32.totalorder %s27, 1
      %p169 = por %p167, %p168
      %p170 = scmp.ne.s32.totalorder %s161, %s162
      %p171 = scmp.eq.s32.totalorder %s27, 0
      %p172 = por %p170, %p171
      %p173 = scmp.ne.s32.totalorder %s161, %s162
      %p174 = scmp.eq.s32.totalorder %s28, 1
      %p175 = por %p173, %p174
      %p177 = scmp.ne.s32.totalorder %s162, %s176
      %p178 = scmp.eq.s32.totalorder %s28, 0
      %p179 = por %p177, %p178
      %s181 = sadd.s32 %s180, 1
      %p184 = scmp.eq.s32.totalorder %s22, 1
      %p185 = scmp.ne.s32.totalorder %s180, %s182
      %p186 = scmp.eq.s32.totalorder %s22, 0
      %p187 = por %p185, %p186
      %p188 = scmp.ne.s32.totalorder %s180, %s182
      %p189 = scmp.eq.s32.totalorder %s27, 1
      %p190 = por %p188, %p189
      %p191 = scmp.ne.s32.totalorder %s182, %s183
      %p192 = scmp.eq.s32.totalorder %s27, 0
      %p193 = por %p191, %p192
      %p194 = scmp.ne.s32.totalorder %s182, %s183
      %p195 = scmp.eq.s32.totalorder %s28, 1
      %p196 = por %p194, %p195
      %p198 = scmp.ne.s32.totalorder %s183, %s197
      %p199 = scmp.eq.s32.totalorder %s28, 0
      %p200 = por %p198, %p199
      %s201 = ssub.s32 %s31, %s40
      %p202 = scmp.eq.s32.totalorder %s201, 0
      %s204 = sadd.s32 %s203, 1
      %s205 = scalar_select %p202, %s203, %s204
      %p208 = pneg %p202
      %p209 = scmp.eq.s32.totalorder %s22, 1
      %p210 = por %p208, %p209
      %p211 = scmp.ne.s32.totalorder %s203, %s206
      %p212 = scmp.eq.s32.totalorder %s22, 0
      %p213 = por %p211, %p212
      %p214 = scmp.ne.s32.totalorder %s203, %s206
      %p215 = scmp.eq.s32.totalorder %s27, 1
      %p216 = por %p214, %p215
      %p217 = scmp.ne.s32.totalorder %s206, %s207
      %p218 = scmp.eq.s32.totalorder %s27, 0
      %p219 = por %p217, %p218
      %p220 = scmp.ne.s32.totalorder %s206, %s207
      %p221 = scmp.eq.s32.totalorder %s28, 1
      %p222 = por %p220, %p221
      %p224 = scmp.ne.s32.totalorder %s207, %s223
      %p225 = scmp.eq.s32.totalorder %s28, 0
      %p226 = por %p224, %p225
      %s227 = ssub.s32 %s31, %s40
      %p228 = scmp.eq.s32.totalorder %s227, 0
      %s230 = sadd.s32 %s229, 1
      %s231 = scalar_select %p228, %s229, %s230
      %p234 = pneg %p228
      %p235 = scmp.eq.s32.totalorder %s22, 1
      %p236 = por %p234, %p235
      %p237 = scmp.ne.s32.totalorder %s229, %s232
      %p238 = scmp.eq.s32.totalorder %s22, 0
      %p239 = por %p237, %p238
      %p240 = scmp.ne.s32.totalorder %s229, %s232
      %p241 = scmp.eq.s32.totalorder %s27, 1
      %p242 = por %p240, %p241
      %p243 = scmp.ne.s32.totalorder %s232, %s233
      %p244 = scmp.eq.s32.totalorder %s27, 0
      %p245 = por %p243, %p244
      %p246 = scmp.ne.s32.totalorder %s232, %s233
      %p247 = scmp.eq.s32.totalorder %s28, 1
      %p248 = por %p246, %p247
      %p250 = scmp.ne.s32.totalorder %s233, %s249
      %p251 = scmp.eq.s32.totalorder %s28, 0
      %p252 = por %p250, %p251
      %s253 = ssub.s32 %s31, %s40
      %p254 = scmp.eq.s32.totalorder %s253, 0
      %s256 = sadd.s32 %s255, 1
      %s257 = scalar_select %p254, %s255, %s256
      %p260 = pneg %p254
      %p261 = scmp.eq.s32.totalorder %s22, 1
      %p262 = por %p260, %p261
      %p263 = scmp.ne.s32.totalorder %s255, %s258
      %p264 = scmp.eq.s32.totalorder %s22, 0
      %p265 = por %p263, %p264
      %p266 = scmp.ne.s32.totalorder %s255, %s258
      %p267 = scmp.eq.s32.totalorder %s27, 1
      %p268 = por %p266, %p267
      %p269 = scmp.ne.s32.totalorder %s258, %s259
      %p270 = scmp.eq.s32.totalorder %s27, 0
      %p271 = por %p269, %p270
      %p272 = scmp.ne.s32.totalorder %s258, %s259
      %p273 = scmp.eq.s32.totalorder %s28, 1
      %p274 = por %p272, %p273
      %p276 = scmp.ne.s32.totalorder %s259, %s275
      %p277 = scmp.eq.s32.totalorder %s28, 0
      %p278 = por %p276, %p277
      %s280 = sadd.s32 %s279, 1
      %p283 = scmp.eq.s32.totalorder %s22, 1
      %p284 = scmp.ne.s32.totalorder %s279, %s281
      %p285 = scmp.eq.s32.totalorder %s22, 0
      %p286 = por %p284, %p285
      %p287 = scmp.ne.s32.totalorder %s279, %s281
      %p288 = scmp.eq.s32.totalorder %s27, 1
      %p289 = por %p287, %p288
      %p290 = scmp.ne.s32.totalorder %s281, %s282
      %p291 = scmp.eq.s32.totalorder %s27, 0
      %p292 = por %p290, %p291
      %p293 = scmp.ne.s32.totalorder %s281, %s282
      %p294 = scmp.eq.s32.totalorder %s28, 1
      %p295 = por %p293, %p294
      %p297 = scmp.ne.s32.totalorder %s282, %s296
      %p298 = scmp.eq.s32.totalorder %s28, 0
      %p299 = por %p297, %p298
      %s301 = sadd.s32 %s300, 1
      %p304 = scmp.eq.s32.totalorder %s22, 1
      %p305 = scmp.ne.s32.totalorder %s300, %s302
      %p306 = scmp.eq.s32.totalorder %s22, 0
      %p307 = por %p305, %p306
      %p308 = scmp.ne.s32.totalorder %s300, %s302
      %p309 = scmp.eq.s32.totalorder %s27, 1
      %p310 = por %p308, %p309
      %p311 = scmp.ne.s32.totalorder %s302, %s303
      %p312 = scmp.eq.s32.totalorder %s27, 0
      %p313 = por %p311, %p312
      %p314 = scmp.ne.s32.totalorder %s302, %s303
      %p315 = scmp.eq.s32.totalorder %s28, 1
      %p316 = por %p314, %p315
      %p318 = scmp.ne.s32.totalorder %s303, %s317
      %p319 = scmp.eq.s32.totalorder %s28, 0
      %p320 = por %p318, %p319
      %s322 = sadd.s32 %s321, 1
      %p325 = scmp.eq.s32.totalorder %s22, 1
      %p326 = scmp.ne.s32.totalorder %s321, %s323
      %p327 = scmp.eq.s32.totalorder %s22, 0
      %p328 = por %p326, %p327
      %p329 = scmp.ne.s32.totalorder %s321, %s323
      %p330 = scmp.eq.s32.totalorder %s27, 1
      %p331 = por %p329, %p330
      %p332 = scmp.ne.s32.totalorder %s323, %s324
      %p333 = scmp.eq.s32.totalorder %s27, 0
      %p334 = por %p332, %p333
      %p335 = scmp.ne.s32.totalorder %s323, %s324
      %p336 = scmp.eq.s32.totalorder %s28, 1
      %p337 = por %p335, %p336
      %p339 = scmp.ne.s32.totalorder %s324, %s338
      %p340 = scmp.eq.s32.totalorder %s28, 0
      %p341 = por %p339, %p340
      %s342 = ssub.s32 %s29, %s48
      %s343 = ssub.s32 %s30, %s44
      %s344 = sor.u32 %s342, %s343
      %p345 = scmp.eq.s32.totalorder %s344, 0
      %s347 = sadd.s32 %s346, 1
      %s348 = scalar_select %p345, %s346, %s347
      %p351 = pneg %p345
      %p352 = scmp.eq.s32.totalorder %s22, 1
      %p353 = por %p351, %p352
      %p354 = scmp.ne.s32.totalorder %s346, %s349
      %p355 = scmp.eq.s32.totalorder %s22, 0
      %p356 = por %p354, %p355
      %p357 = scmp.ne.s32.totalorder %s346, %s349
      %p358 = scmp.eq.s32.totalorder %s27, 1
      %p359 = por %p357, %p358
      %p360 = scmp.ne.s32.totalorder %s349, %s350
      %p361 = scmp.eq.s32.totalorder %s27, 0
      %p362 = por %p360, %p361
      %p363 = scmp.ne.s32.totalorder %s349, %s350
      %p364 = scmp.eq.s32.totalorder %s28, 1
      %p365 = por %p363, %p364
      %p367 = scmp.ne.s32.totalorder %s350, %s366
      %p368 = scmp.eq.s32.totalorder %s28, 0
      %p369 = por %p367, %p368
      %p370 = scmp.le.s32.totalorder 1, %s22
      %p371 = scmp.lt.s32.totalorder %s22, 3
      %p372 = pnand %p370, %p371
      %p373 = pneg %p372
      // Predicated region
      $region9: #{tpu_custom_call.1} parent=5 // pred_check
        _
      $region10: #{tpu_custom_call.1} parent=5 // pred_check_branch
        %375 = sbr.rel (%p372) target = $region12
      $region11: #{tpu_custom_call.1} parent=5 // pred_region
        %s376 = ssub.s32 %s22, 1
        // Predicated region
        $region13: #{tpu_custom_call.1} parent=11 // pred_check
          %p377 = pneg %p88
        $region14: #{tpu_custom_call.1} parent=11 // pred_check_branch
          %379 = sbr.rel (%p377) target = $region16
        $region15: #{tpu_custom_call.1} parent=11 // pred_region
          _
        $region16: #{tpu_custom_call.1} parent=11 // pred_fallthru
          _
        // Predicated region
        $region17: #{tpu_custom_call.1} parent=11 // pred_check
          %p380 = pneg %p109
        $region18: #{tpu_custom_call.1} parent=11 // pred_check_branch
          %382 = sbr.rel (%p380) target = $region20
        $region19: #{tpu_custom_call.1} parent=11 // pred_region
          _
        $region20: #{tpu_custom_call.1} parent=11 // pred_fallthru
          _
        // Predicated region
        $region21: #{tpu_custom_call.1} parent=11 // pred_check
          %p383 = pneg %p130
        $region22: #{tpu_custom_call.1} parent=11 // pred_check_branch
          %385 = sbr.rel (%p383) target = $region24
        $region23: #{tpu_custom_call.1} parent=11 // pred_region
          _
        $region24: #{tpu_custom_call.1} parent=11 // pred_fallthru
          _
        // Predicated region
        $region25: #{tpu_custom_call.1} parent=11 // pred_check
          %p386 = pneg %p151
        $region26: #{tpu_custom_call.1} parent=11 // pred_check_branch
          %388 = sbr.rel (%p386) target = $region28
        $region27: #{tpu_custom_call.1} parent=11 // pred_region
          _
        $region28: #{tpu_custom_call.1} parent=11 // pred_fallthru
          _
        // Predicated region
        $region29: #{tpu_custom_call.1} parent=11 // pred_check
          %p389 = pneg %p172
        $region30: #{tpu_custom_call.1} parent=11 // pred_check_branch
          %391 = sbr.rel (%p389) target = $region32
        $region31: #{tpu_custom_call.1} parent=11 // pred_region
          _
        $region32: #{tpu_custom_call.1} parent=11 // pred_fallthru
          _
        // Predicated region
        $region33: #{tpu_custom_call.1} parent=11 // pred_check
          %p392 = pneg %p193
        $region34: #{tpu_custom_call.1} parent=11 // pred_check_branch
          %394 = sbr.rel (%p392) target = $region36
        $region35: #{tpu_custom_call.1} parent=11 // pred_region
          _
        $region36: #{tpu_custom_call.1} parent=11 // pred_fallthru
          _
        // Predicated region
        $region37: #{tpu_custom_call.1} parent=11 // pred_check
          %p395 = pneg %p219
        $region38: #{tpu_custom_call.1} parent=11 // pred_check_branch
          %397 = sbr.rel (%p395) target = $region40
        $region39: #{tpu_custom_call.1} parent=11 // pred_region
          %p398 = scmp.lt.s32.totalorder %s34, 0
          %s399 = scalar_select %p398, %s34, 0
          %s400 = smul.addr %s399, 4
          %s401 = scalar_lea.vmem %s7, %s400
        $region40: #{tpu_custom_call.1} parent=11 // pred_fallthru
          _
        // Predicated region
        $region41: #{tpu_custom_call.1} parent=11 // pred_check
          %p402 = pneg %p245
        $region42: #{tpu_custom_call.1} parent=11 // pred_check_branch
          %404 = sbr.rel (%p402) target = $region44
        $region43: #{tpu_custom_call.1} parent=11 // pred_region
          %p405 = scmp.lt.s32.totalorder %s34, 0
          %s406 = scalar_select %p405, %s34, 0
          %s407 = scalar_lea.vmem %s8, %s406
        $region44: #{tpu_custom_call.1} parent=11 // pred_fallthru
          _
        // Predicated region
        $region45: #{tpu_custom_call.1} parent=11 // pred_check
          %p408 = pneg %p271
        $region46: #{tpu_custom_call.1} parent=11 // pred_check_branch
          %410 = sbr.rel (%p408) target = $region48
        $region47: #{tpu_custom_call.1} parent=11 // pred_region
          %s411 = smul.u32 8, %s34
          %p412 = scmp.lt.s32.totalorder %s411, 7
          %s413 = scalar_select %p412, %s411, 7
          %s414 = smul.addr %s413, 4
          %s415 = scalar_lea.vmem %s9, %s414
          %s416 = smul.u32 8, %s34
        $region48: #{tpu_custom_call.1} parent=11 // pred_fallthru
          _
        // Predicated region
        $region49: #{tpu_custom_call.1} parent=11 // pred_check
          %p417 = pneg %p292
        $region50: #{tpu_custom_call.1} parent=11 // pred_check_branch
          %419 = sbr.rel (%p417) target = $region52
        $region51: #{tpu_custom_call.1} parent=11 // pred_region
          _
        $region52: #{tpu_custom_call.1} parent=11 // pred_fallthru
          _
        // Predicated region
        $region53: #{tpu_custom_call.1} parent=11 // pred_check
          %p420 = pneg %p313
        $region54: #{tpu_custom_call.1} parent=11 // pred_check_branch
          %422 = sbr.rel (%p420) target = $region56
        $region55: #{tpu_custom_call.1} parent=11 // pred_region
          _
        $region56: #{tpu_custom_call.1} parent=11 // pred_fallthru
          _
        // Predicated region
        $region57: #{tpu_custom_call.1} parent=11 // pred_check
          %p423 = pneg %p334
        $region58: #{tpu_custom_call.1} parent=11 // pred_check_branch
          %425 = sbr.rel (%p423) target = $region60
        $region59: #{tpu_custom_call.1} parent=11 // pred_region
          _
        $region60: #{tpu_custom_call.1} parent=11 // pred_fallthru
          _
      $region12: #{tpu_custom_call.1} parent=5 // pred_fallthru
        _
      %p426 = scmp.lt.s32.totalorder %s22, 2
      // Predicated region
      $region61: #{tpu_custom_call.1} parent=5 // pred_check
        %p427 = pneg %p426
      $region62: #{tpu_custom_call.1} parent=5 // pred_check_branch
        %429 = sbr.rel (%p427) target = $region64
      $region63: #{tpu_custom_call.1} parent=5 // pred_region
        // Predicated region
        $region65: #{tpu_custom_call.1} parent=63 // pred_check
          %p430 = pneg %p61
        $region66: #{tpu_custom_call.1} parent=63 // pred_check_branch
          %432 = sbr.rel (%p430) target = $region68
        $region67: #{tpu_custom_call.1} parent=63 // pred_region
          %p433 = scmp.lt.s32.totalorder %s29, 1
          %s434 = scalar_select %p433, %s29, 1
          %s435 = smul.addr %s434, 8
          %s436 = scalar_lea.vmem %s0, %s435
        $region68: #{tpu_custom_call.1} parent=63 // pred_fallthru
          _
      $region64: #{tpu_custom_call.1} parent=5 // pred_fallthru
        _
      %p437 = scmp.le.s32.totalorder 1, %s22
      %p438 = scmp.lt.s32.totalorder %s22, 3
      %p439 = pnand %p437, %p438
      %p440 = pneg %p439
      // Predicated region
      $region69: #{tpu_custom_call.1} parent=5 // pred_check
        _
      $region70: #{tpu_custom_call.1} parent=5 // pred_check_branch
        %442 = sbr.rel (%p439) target = $region72
      $region71: #{tpu_custom_call.1} parent=5 // pred_region
        %s443 = ssub.s32 %s22, 1
        %p444 = scmp.lt.s32.totalorder %s32, 1
        %s445 = scalar_select %p444, %s32, 1
        %s446 = smul.addr %s445, 8
        %s447 = scalar_lea.vmem %s0, %s446
        %p448 = pneg %p67
        %p449 = pneg %p64
        %p450 = pneg %p88
        %p451 = pneg %p85
        %p452 = pneg %p109
        %p453 = pneg %p106
        %p454 = pneg %p130
        %p455 = pneg %p127
        %p456 = pneg %p151
        %p457 = pneg %p148
        %p458 = pneg %p172
        %p459 = pneg %p169
        %p460 = pneg %p193
        %p461 = pneg %p190
        %p462 = scmp.lt.s32.totalorder %s34, 0
        %s463 = scalar_select %p462, %s34, 0
        %s464 = smul.addr %s463, 4
        %s465 = scalar_lea.vmem %s7, %s464
        %p466 = pneg %p219
        %p467 = pneg %p216
        %p468 = scmp.lt.s32.totalorder %s34, 0
        %s469 = scalar_select %p468, %s34, 0
        %s470 = scalar_lea.vmem %s8, %s469
        %p471 = pneg %p245
        %p472 = pneg %p242
        %s473 = smul.u32 8, %s34
        %p474 = scmp.lt.s32.totalorder %s473, 7
        %s475 = scalar_select %p474, %s473, 7
        %s476 = smul.addr %s475, 4
        %s477 = scalar_lea.vmem %s9, %s476
        %p478 = pneg %p271
        %p479 = pneg %p268
        %p480 = pneg %p292
        %p481 = pneg %p289
        %p482 = pneg %p313
        %p483 = pneg %p310
        %p484 = pneg %p334
        %p485 = pneg %p331
        %p486 = pneg %p362
        %p487 = pneg %p359
        %s488 = sand.u32 %s349, 1
        %s489 = scalar_lea.sflag [#allocation5], %s488
        %s490 = sand.u32 %s349, 1
        %s491 = smul.addr %s490, 8
        %s492 = scalar_lea.vmem [#allocation4], %s491
        %p493 = scmp.lt.s32.totalorder %s32, 1
        %s494 = scalar_select %p493, %s32, 1
        %s495 = smul.addr %s494, 8
        %s496 = scalar_lea.vmem %s0, %s495
        %p497 = scmp.lt.s32.totalorder %s34, 0
        %s498 = scalar_select %p497, %s34, 0
        %s499 = smul.addr %s498, 4
        %s500 = scalar_lea.vmem %s7, %s499
        %p501 = scmp.lt.s32.totalorder %s34, 0
        %s502 = scalar_select %p501, %s34, 0
        %s503 = scalar_lea.vmem %s8, %s502
        %s504 = smul.u32 8, %s34
        %p505 = scmp.lt.s32.totalorder %s504, 7
        %s506 = scalar_select %p505, %s504, 7
        %s507 = smul.addr %s506, 4
        %s508 = scalar_lea.vmem %s9, %s507
        %s509 = smul.u32 8, %s34
        %p511 = scmp.eq.s32.totalorder %s34, 0
        // Predicated region
        $region73: #{tpu_custom_call.1} parent=71 // pred_check
          %p512 = pneg %p511
        $region74: #{tpu_custom_call.1} parent=71 // pred_check_branch
          %514 = sbr.rel (%p512) target = $region76
        $region75: #{tpu_custom_call.1} parent=71 // pred_region
          %v515 = vld [vmem:[%s496] sm:$0xff]
          %v516 = vpack.c.bf16 %v515, %v515
          %s517 = smul.u32 %s33, 8
          %s518 = scalar_lea.vmem %s496, %s517
          %v519 = vld [vmem:[%s518] sm:$0xff]
          %v520 = vpack.c.bf16 %v519, %v519
          %v521 = vld [vmem:[%s1] sm:$0xf]
          %v522 = vld [vmem:[%s1 + $0x4] sm:$0xf]
          %v523 = vld [vmem:[%s1 + $0x8] sm:$0xf]
          %v524 = vld [vmem:[%s1 + $0xc] sm:$0xf]
          %v529 = vunpack.c.l.b16 %v521
          %v530 = vunpack.c.l.b16 %v522
          %v531 = vunpack.c.l.b16 %v523
          %v532 = vunpack.c.l.b16 %v524
          %v533 = vpack.c.b16 %v530, %v529
          %v534 = vpack.c.b16 %v532, %v531
          %vm537 = vcmask 261120
          %v539 = vsel %vm537, %v520, 0
          %541 = vmatprep.subr.bf16.mxu0 0
          %542 = vmatpush1.bf16.msra.mxu0 0
          %543 = vmatprep.subr.bf16.mxu0 0
          %544 = vmatpush1.bf16.msra.mxu0 0
          %545 = vmatprep.subr.bf16.mxu0 0
          %546 = vmatpush1.bf16.msra.mxu0 0
          %547 = vmatprep.subr.bf16.mxu0 0
          %548 = vmatpush1.bf16.msra.mxu0 0
          %549 = vmatprep.subr.bf16.mxu0 0
          %550 = vmatpush1.bf16.msra.mxu0 0
          %551 = vmatprep.subr.bf16.mxu0 0
          %552 = vmatpush1.bf16.msra.mxu0 0
          %553 = vmatprep.subr.bf16.mxu0 0
          %554 = vmatpush1.bf16.msra.mxu0 %v534
          %555 = vmatprep.subr.bf16.mxu0 0
          %556 = vmatpush1.bf16.msra.mxu0 %v533
          %557 = vmatprep.subr.bf16.mxu0 0
          %558 = vmatpush2.bf16.msra.mxu0 0
          %559 = vmatprep.subr.bf16.mxu0 0
          %560 = vmatpush2.bf16.msra.mxu0 0
          %561 = vmatprep.subr.bf16.mxu0 0
          %562 = vmatpush2.bf16.msra.mxu0 0
          %563 = vmatprep.subr.bf16.mxu0 0
          %564 = vmatpush2.bf16.msra.mxu0 0
          %565 = vmatprep.subr.bf16.mxu0 0
          %566 = vmatpush2.bf16.msra.mxu0 0
          %567 = vmatprep.subr.bf16.mxu0 0
          %568 = vmatpush2.bf16.msra.mxu0 0
          %569 = vmatprep.subr.bf16.mxu0 0
          %570 = vmatpush2.bf16.msra.mxu0 0
          %571 = vmatprep.subr.bf16.mxu0 0
          %572 = vmatpush2.bf16.msra.mxu0 0
          %573 = vmatprep.mubr.bf16.mxu0 0
          %574 = vmatmul.mubr.bf16.gmra.mxu0 %v539
          %v575 = vpop.f32.mrf.mxu0
          %v576 = vadd.f32 0.0, %v575
          %v577 = vpop.f32.mrf.mxu0
          %v578 = vpop.f32.mrf.mxu0
          %v579 = vpop.f32.mrf.mxu0
          %580 = vdwg.mxu0
          %v581 = vpack.c.bf16 %v576, %v576
          %v582 = vld [vmem:[%s2] sm:$0xf]
          %v583 = vld [vmem:[%s2 + $0x4] sm:$0xf]
          %v584 = vld [vmem:[%s2 + $0x8] sm:$0xf]
          %v585 = vld [vmem:[%s2 + $0xc] sm:$0xf]
          %v590 = vunpack.c.l.b16 %v582
          %v591 = vunpack.c.l.b16 %v583
          %v592 = vunpack.c.l.b16 %v584
          %v593 = vunpack.c.l.b16 %v585
          %v594 = vpack.c.b16 %v591, %v590
          %v595 = vpack.c.b16 %v593, %v592
          %v599 = vsel %vm537, %v516, 0
          %601 = vmatprep.subr.bf16.mxu0 0
          %602 = vmatpush1.bf16.msra.mxu0 0
          %603 = vmatprep.subr.bf16.mxu0 0
          %604 = vmatpush1.bf16.msra.mxu0 0
          %605 = vmatprep.subr.bf16.mxu0 0
          %606 = vmatpush1.bf16.msra.mxu0 0
          %607 = vmatprep.subr.bf16.mxu0 0
          %608 = vmatpush1.bf16.msra.mxu0 0
          %609 = vmatprep.subr.bf16.mxu0 0
          %610 = vmatpush1.bf16.msra.mxu0 0
          %611 = vmatprep.subr.bf16.mxu0 0
          %612 = vmatpush1.bf16.msra.mxu0 0
          %613 = vmatprep.subr.bf16.mxu0 0
          %614 = vmatpush1.bf16.msra.mxu0 %v595
          %615 = vmatprep.subr.bf16.mxu0 0
          %616 = vmatpush1.bf16.msra.mxu0 %v594
          %617 = vmatprep.subr.bf16.mxu0 0
          %618 = vmatpush2.bf16.msra.mxu0 0
          %619 = vmatprep.subr.bf16.mxu0 0
          %620 = vmatpush2.bf16.msra.mxu0 0
          %621 = vmatprep.subr.bf16.mxu0 0
          %622 = vmatpush2.bf16.msra.mxu0 0
          %623 = vmatprep.subr.bf16.mxu0 0
          %624 = vmatpush2.bf16.msra.mxu0 0
          %625 = vmatprep.subr.bf16.mxu0 0
          %626 = vmatpush2.bf16.msra.mxu0 0
          %627 = vmatprep.subr.bf16.mxu0 0
          %628 = vmatpush2.bf16.msra.mxu0 0
          %629 = vmatprep.subr.bf16.mxu0 0
          %630 = vmatpush2.bf16.msra.mxu0 0
          %631 = vmatprep.subr.bf16.mxu0 0
          %632 = vmatpush2.bf16.msra.mxu0 0
          %633 = vmatprep.mubr.bf16.mxu0 0
          %634 = vmatmul.mubr.bf16.gmra.mxu0 %v599
          %v635 = vpop.f32.mrf.mxu0
          %v636 = vadd.f32 0.0, %v635
          %v637 = vpop.f32.mrf.mxu0
          %v638 = vpop.f32.mrf.mxu0
          %v639 = vpop.f32.mrf.mxu0
          %640 = vdwg.mxu0
          %v641 = vpack.c.bf16 %v636, %v636
          %v642 = vld [vmem:[%s3] sm:$0xf]
          %v643 = vld [vmem:[%s3 + $0x4] sm:$0xf]
          %v644 = vld [vmem:[%s3 + $0x8] sm:$0xf]
          %v645 = vld [vmem:[%s3 + $0xc] sm:$0xf]
          %v650 = vunpack.c.l.b16 %v642
          %v651 = vunpack.c.l.b16 %v643
          %v652 = vunpack.c.l.b16 %v644
          %v653 = vunpack.c.l.b16 %v645
          %v654 = vpack.c.b16 %v651, %v650
          %v655 = vpack.c.b16 %v653, %v652
          %658 = vmatprep.subr.bf16.mxu0 0
          %659 = vmatpush1.bf16.msra.mxu0 0
          %660 = vmatprep.subr.bf16.mxu0 0
          %661 = vmatpush1.bf16.msra.mxu0 0
          %662 = vmatprep.subr.bf16.mxu0 0
          %663 = vmatpush1.bf16.msra.mxu0 0
          %664 = vmatprep.subr.bf16.mxu0 0
          %665 = vmatpush1.bf16.msra.mxu0 0
          %666 = vmatprep.subr.bf16.mxu0 0
          %667 = vmatpush1.bf16.msra.mxu0 0
          %668 = vmatprep.subr.bf16.mxu0 0
          %669 = vmatpush1.bf16.msra.mxu0 0
          %670 = vmatprep.subr.bf16.mxu0 0
          %671 = vmatpush1.bf16.msra.mxu0 %v655
          %672 = vmatprep.subr.bf16.mxu0 0
          %673 = vmatpush1.bf16.msra.mxu0 %v654
          %674 = vmatprep.subr.bf16.mxu0 0
          %675 = vmatpush2.bf16.msra.mxu0 0
          %676 = vmatprep.subr.bf16.mxu0 0
          %677 = vmatpush2.bf16.msra.mxu0 0
          %678 = vmatprep.subr.bf16.mxu0 0
          %679 = vmatpush2.bf16.msra.mxu0 0
          %680 = vmatprep.subr.bf16.mxu0 0
          %681 = vmatpush2.bf16.msra.mxu0 0
          %682 = vmatprep.subr.bf16.mxu0 0
          %683 = vmatpush2.bf16.msra.mxu0 0
          %684 = vmatprep.subr.bf16.mxu0 0
          %685 = vmatpush2.bf16.msra.mxu0 0
          %686 = vmatprep.subr.bf16.mxu0 0
          %687 = vmatpush2.bf16.msra.mxu0 0
          %688 = vmatprep.subr.bf16.mxu0 0
          %689 = vmatpush2.bf16.msra.mxu0 0
          %690 = vmatprep.mubr.bf16.mxu0 0
          %691 = vmatmul.mubr.bf16.gmra.mxu0 %v599
          %v692 = vpop.f32.mrf.mxu0
          %v693 = vadd.f32 0.0, %v692
          %v694 = vpop.f32.mrf.mxu0
          %v695 = vpop.f32.mrf.mxu0
          %v696 = vpop.f32.mrf.mxu0
          %697 = vdwg.mxu0
          %v698 = vpack.c.bf16 %v693, %v693
          %vm699 = vcmask 64512
          %v701 = vsel %vm699, %v581, 0
          %v704 = vsel %vm699, %v641, 0
          %706 = vmatprep.subr.bf16.mxu0 0
          %707 = vmatpush1.bf16.xpose.msra.mxu0 0
          %708 = vmatprep.subr.bf16.mxu0 0
          %709 = vmatpush1.bf16.xpose.msra.mxu0 0
          %710 = vmatprep.subr.bf16.mxu0 0
          %711 = vmatpush1.bf16.xpose.msra.mxu0 0
          %712 = vmatprep.subr.bf16.mxu0 0
          %713 = vmatpush1.bf16.xpose.msra.mxu0 0
          %714 = vmatprep.subr.bf16.mxu0 0
          %715 = vmatpush1.bf16.xpose.msra.mxu0 0
          %716 = vmatprep.subr.bf16.mxu0 0
          %717 = vmatpush1.bf16.xpose.msra.mxu0 0
          %718 = vmatprep.subr.bf16.mxu0 0
          %719 = vmatpush1.bf16.xpose.msra.mxu0 0
          %720 = vmatprep.subr.bf16.mxu0 0
          %721 = vmatpush1.bf16.xpose.msra.mxu0 %v704
          %722 = vmatprep.subr.bf16.mxu0 0
          %723 = vmatpush2.bf16.xpose.msra.mxu0 0
          %724 = vmatprep.subr.bf16.mxu0 0
          %725 = vmatpush2.bf16.xpose.msra.mxu0 0
          %726 = vmatprep.subr.bf16.mxu0 0
          %727 = vmatpush2.bf16.xpose.msra.mxu0 0
          %728 = vmatprep.subr.bf16.mxu0 0
          %729 = vmatpush2.bf16.xpose.msra.mxu0 0
          %730 = vmatprep.subr.bf16.mxu0 0
          %731 = vmatpush2.bf16.xpose.msra.mxu0 0
          %732 = vmatprep.subr.bf16.mxu0 0
          %733 = vmatpush2.bf16.xpose.msra.mxu0 0
          %734 = vmatprep.subr.bf16.mxu0 0
          %735 = vmatpush2.bf16.xpose.msra.mxu0 0
          %736 = vmatprep.subr.bf16.mxu0 0
          %737 = vmatpush2.bf16.xpose.msra.mxu0 0
          %738 = vmatprep.mubr.bf16.mxu0 0
          %739 = vmatmul.mubr.bf16.gmra.mxu0 %v701
          %v740 = vpop.f32.mrf.mxu0
          %v741 = vadd.f32 0.0, %v740
          %v742 = vpop.f32.mrf.mxu0
          %v743 = vpop.f32.mrf.mxu0
          %v744 = vpop.f32.mrf.mxu0
          %745 = vdwg.mxu0
          %v746 = vsel %vm699, %v741, -inf
          %747 = vmax.xlane.f32.xlu0 %v746
          %v748 = vpop.xlane.xlu0 %747
          %v749 = vsub.f32 %v741, %v748
          %v750 = vmul.f32 %v749, 1.442695
          %v751 = vpow.pop %v750
          %v752 = vsel %vm699, %v751, 0.0
          %753 = vadd.xlane.f32.xlu0 %v752
          %v754 = vpop.xlane.xlu0 %753
          %v755 = vrcp.pop %v754
          %v756 = vpack.c.bf16 %v751, %v751
          %v758 = vsel %vm699, %v756, 0
          %vm760 = vcmask 1043456
          %v762 = vsel %vm760, %v698, 0
          %764 = vmatprep.subr.bf16.mxu0 0
          %765 = vmatpush1.bf16.msra.mxu0 0
          %766 = vmatprep.subr.bf16.mxu0 0
          %767 = vmatpush1.bf16.msra.mxu0 0
          %768 = vmatprep.subr.bf16.mxu0 0
          %769 = vmatpush1.bf16.msra.mxu0 0
          %770 = vmatprep.subr.bf16.mxu0 0
          %771 = vmatpush1.bf16.msra.mxu0 0
          %772 = vmatprep.subr.bf16.mxu0 0
          %773 = vmatpush1.bf16.msra.mxu0 0
          %774 = vmatprep.subr.bf16.mxu0 0
          %775 = vmatpush1.bf16.msra.mxu0 0
          %776 = vmatprep.subr.bf16.mxu0 0
          %777 = vmatpush1.bf16.msra.mxu0 0
          %778 = vmatprep.subr.bf16.mxu0 0
          %779 = vmatpush1.bf16.msra.mxu0 %v762
          %780 = vmatprep.subr.bf16.mxu0 0
          %781 = vmatpush2.bf16.msra.mxu0 0
          %782 = vmatprep.subr.bf16.mxu0 0
          %783 = vmatpush2.bf16.msra.mxu0 0
          %784 = vmatprep.subr.bf16.mxu0 0
          %785 = vmatpush2.bf16.msra.mxu0 0
          %786 = vmatprep.subr.bf16.mxu0 0
          %787 = vmatpush2.bf16.msra.mxu0 0
          %788 = vmatprep.subr.bf16.mxu0 0
          %789 = vmatpush2.bf16.msra.mxu0 0
          %790 = vmatprep.subr.bf16.mxu0 0
          %791 = vmatpush2.bf16.msra.mxu0 0
          %792 = vmatprep.subr.bf16.mxu0 0
          %793 = vmatpush2.bf16.msra.mxu0 0
          %794 = vmatprep.subr.bf16.mxu0 0
          %795 = vmatpush2.bf16.msra.mxu0 0
          %796 = vmatprep.mubr.bf16.mxu0 0
          %797 = vmatmul.mubr.bf16.gmra.mxu0 %v758
          %v798 = vpop.f32.mrf.mxu0
          %v799 = vadd.f32 0.0, %v798
          %v800 = vpop.f32.mrf.mxu0
          %v801 = vpop.f32.mrf.mxu0
          %v802 = vpop.f32.mrf.mxu0
          %803 = vdwg.mxu0
          %v804 = vmul.f32 %v799, %v755
          %v805 = vpack.c.bf16 %v804, %v804
          %v806 = vld [vmem:[%s4] sm:$0xf]
          %808 = vrot.lane.b32.xlu0 %v581, 120
          %v809 = vpop.permute.xlu0 %808
          %811 = vrot.lane.b32.xlu0 %v641, 120
          %v812 = vpop.permute.xlu0 %811
          %v814 = vsel %vm699, %v809, 0
          %v817 = vsel %vm699, %v812, 0
          %819 = vmatprep.subr.bf16.mxu0 0
          %820 = vmatpush1.bf16.xpose.msra.mxu0 0
          %821 = vmatprep.subr.bf16.mxu0 0
          %822 = vmatpush1.bf16.xpose.msra.mxu0 0
          %823 = vmatprep.subr.bf16.mxu0 0
          %824 = vmatpush1.bf16.xpose.msra.mxu0 0
          %825 = vmatprep.subr.bf16.mxu0 0
          %826 = vmatpush1.bf16.xpose.msra.mxu0 0
          %827 = vmatprep.subr.bf16.mxu0 0
          %828 = vmatpush1.bf16.xpose.msra.mxu0 0
          %829 = vmatprep.subr.bf16.mxu0 0
          %830 = vmatpush1.bf16.xpose.msra.mxu0 0
          %831 = vmatprep.subr.bf16.mxu0 0
          %832 = vmatpush1.bf16.xpose.msra.mxu0 0
          %833 = vmatprep.subr.bf16.mxu0 0
          %834 = vmatpush1.bf16.xpose.msra.mxu0 %v817
          %835 = vmatprep.subr.bf16.mxu0 0
          %836 = vmatpush2.bf16.xpose.msra.mxu0 0
          %837 = vmatprep.subr.bf16.mxu0 0
          %838 = vmatpush2.bf16.xpose.msra.mxu0 0
          %839 = vmatprep.subr.bf16.mxu0 0
          %840 = vmatpush2.bf16.xpose.msra.mxu0 0
          %841 = vmatprep.subr.bf16.mxu0 0
          %842 = vmatpush2.bf16.xpose.msra.mxu0 0
          %843 = vmatprep.subr.bf16.mxu0 0
          %844 = vmatpush2.bf16.xpose.msra.mxu0 0
          %845 = vmatprep.subr.bf16.mxu0 0
          %846 = vmatpush2.bf16.xpose.msra.mxu0 0
          %847 = vmatprep.subr.bf16.mxu0 0
          %848 = vmatpush2.bf16.xpose.msra.mxu0 0
          %849 = vmatprep.subr.bf16.mxu0 0
          %850 = vmatpush2.bf16.xpose.msra.mxu0 0
          %851 = vmatprep.mubr.bf16.mxu0 0
          %852 = vmatmul.mubr.bf16.gmra.mxu0 %v814
          %v853 = vpop.f32.mrf.mxu0
          %v854 = vadd.f32 0.0, %v853
          %v855 = vpop.f32.mrf.mxu0
          %v856 = vpop.f32.mrf.mxu0
          %v857 = vpop.f32.mrf.mxu0
          %858 = vdwg.mxu0
          %v859 = vsel %vm699, %v854, -inf
          %860 = vmax.xlane.f32.xlu0 %v859
          %v861 = vpop.xlane.xlu0 %860
          %v862 = vsub.f32 %v854, %v861
          %v863 = vmul.f32 %v862, 1.442695
          %v864 = vpow.pop %v863
          %v865 = vsel %vm699, %v864, 0.0
          %866 = vadd.xlane.f32.xlu0 %v865
          %v867 = vpop.xlane.xlu0 %866
          %v868 = vrcp.pop %v867
          %v869 = vpack.c.bf16 %v864, %v864
          %871 = vrot.lane.b32.xlu0 %v698, 120
          %v872 = vpop.permute.xlu0 %871
          %v874 = vsel %vm699, %v869, 0
          %v877 = vsel %vm760, %v872, 0
          %879 = vmatprep.subr.bf16.mxu0 0
          %880 = vmatpush1.bf16.msra.mxu0 0
          %881 = vmatprep.subr.bf16.mxu0 0
          %882 = vmatpush1.bf16.msra.mxu0 0
          %883 = vmatprep.subr.bf16.mxu0 0
          %884 = vmatpush1.bf16.msra.mxu0 0
          %885 = vmatprep.subr.bf16.mxu0 0
          %886 = vmatpush1.bf16.msra.mxu0 0
          %887 = vmatprep.subr.bf16.mxu0 0
          %888 = vmatpush1.bf16.msra.mxu0 0
          %889 = vmatprep.subr.bf16.mxu0 0
          %890 = vmatpush1.bf16.msra.mxu0 0
          %891 = vmatprep.subr.bf16.mxu0 0
          %892 = vmatpush1.bf16.msra.mxu0 0
          %893 = vmatprep.subr.bf16.mxu0 0
          %894 = vmatpush1.bf16.msra.mxu0 %v877
          %895 = vmatprep.subr.bf16.mxu0 0
          %896 = vmatpush2.bf16.msra.mxu0 0
          %897 = vmatprep.subr.bf16.mxu0 0
          %898 = vmatpush2.bf16.msra.mxu0 0
          %899 = vmatprep.subr.bf16.mxu0 0
          %900 = vmatpush2.bf16.msra.mxu0 0
          %901 = vmatprep.subr.bf16.mxu0 0
          %902 = vmatpush2.bf16.msra.mxu0 0
          %903 = vmatprep.subr.bf16.mxu0 0
          %904 = vmatpush2.bf16.msra.mxu0 0
          %905 = vmatprep.subr.bf16.mxu0 0
          %906 = vmatpush2.bf16.msra.mxu0 0
          %907 = vmatprep.subr.bf16.mxu0 0
          %908 = vmatpush2.bf16.msra.mxu0 0
          %909 = vmatprep.subr.bf16.mxu0 0
          %910 = vmatpush2.bf16.msra.mxu0 0
          %911 = vmatprep.mubr.bf16.mxu0 0
          %912 = vmatmul.mubr.bf16.gmra.mxu0 %v874
          %v913 = vpop.f32.mrf.mxu0
          %v914 = vadd.f32 0.0, %v913
          %v915 = vpop.f32.mrf.mxu0
          %v916 = vpop.f32.mrf.mxu0
          %v917 = vpop.f32.mrf.mxu0
          %918 = vdwg.mxu0
          %v919 = vmul.f32 %v914, %v868
          %v920 = vpack.c.bf16 %v919, %v919
          %v921 = vld [vmem:[%s4 + $0x4] sm:$0xf]
          %v923 = vsel %vm699, %v920, 0
          %v926 = vsel %vm760, %v921, 0
          %928 = vmatprep.subr.bf16.mxu0 0
          %929 = vmatpush1.bf16.msra.mxu0 0
          %930 = vmatprep.subr.bf16.mxu0 0
          %931 = vmatpush1.bf16.msra.mxu0 0
          %932 = vmatprep.subr.bf16.mxu0 0
          %933 = vmatpush1.bf16.msra.mxu0 0
          %934 = vmatprep.subr.bf16.mxu0 0
          %935 = vmatpush1.bf16.msra.mxu0 0
          %936 = vmatprep.subr.bf16.mxu0 0
          %937 = vmatpush1.bf16.msra.mxu0 0
          %938 = vmatprep.subr.bf16.mxu0 0
          %939 = vmatpush1.bf16.msra.mxu0 0
          %940 = vmatprep.subr.bf16.mxu0 0
          %941 = vmatpush1.bf16.msra.mxu0 0
          %942 = vmatprep.subr.bf16.mxu0 0
          %943 = vmatpush1.bf16.msra.mxu0 %v926
          %944 = vmatprep.subr.bf16.mxu0 0
          %945 = vmatpush2.bf16.msra.mxu0 0
          %946 = vmatprep.subr.bf16.mxu0 0
          %947 = vmatpush2.bf16.msra.mxu0 0
          %948 = vmatprep.subr.bf16.mxu0 0
          %949 = vmatpush2.bf16.msra.mxu0 0
          %950 = vmatprep.subr.bf16.mxu0 0
          %951 = vmatpush2.bf16.msra.mxu0 0
          %952 = vmatprep.subr.bf16.mxu0 0
          %953 = vmatpush2.bf16.msra.mxu0 0
          %954 = vmatprep.subr.bf16.mxu0 0
          %955 = vmatpush2.bf16.msra.mxu0 0
          %956 = vmatprep.subr.bf16.mxu0 0
          %957 = vmatpush2.bf16.msra.mxu0 0
          %958 = vmatprep.subr.bf16.mxu0 0
          %959 = vmatpush2.bf16.msra.mxu0 0
          %960 = vmatprep.mubr.bf16.mxu0 0
          %961 = vmatmul.mubr.bf16.gmra.mxu0 %v923
          %v962 = vpop.f32.mrf.mxu0
          %v963 = vadd.f32 0.0, %v962
          %v964 = vpop.f32.mrf.mxu0
          %v965 = vpop.f32.mrf.mxu0
          %v966 = vpop.f32.mrf.mxu0
          %967 = vdwg.mxu0
          %v969 = vsel %vm699, %v805, 0
          %v972 = vsel %vm760, %v806, 0
          %974 = vmatprep.subr.bf16.mxu0 0
          %975 = vmatpush1.bf16.msra.mxu0 0
          %976 = vmatprep.subr.bf16.mxu0 0
          %977 = vmatpush1.bf16.msra.mxu0 0
          %978 = vmatprep.subr.bf16.mxu0 0
          %979 = vmatpush1.bf16.msra.mxu0 0
          %980 = vmatprep.subr.bf16.mxu0 0
          %981 = vmatpush1.bf16.msra.mxu0 0
          %982 = vmatprep.subr.bf16.mxu0 0
          %983 = vmatpush1.bf16.msra.mxu0 0
          %984 = vmatprep.subr.bf16.mxu0 0
          %985 = vmatpush1.bf16.msra.mxu0 0
          %986 = vmatprep.subr.bf16.mxu0 0
          %987 = vmatpush1.bf16.msra.mxu0 0
          %988 = vmatprep.subr.bf16.mxu0 0
          %989 = vmatpush1.bf16.msra.mxu0 %v972
          %990 = vmatprep.subr.bf16.mxu0 0
          %991 = vmatpush2.bf16.msra.mxu0 0
          %992 = vmatprep.subr.bf16.mxu0 0
          %993 = vmatpush2.bf16.msra.mxu0 0
          %994 = vmatprep.subr.bf16.mxu0 0
          %995 = vmatpush2.bf16.msra.mxu0 0
          %996 = vmatprep.subr.bf16.mxu0 0
          %997 = vmatpush2.bf16.msra.mxu0 0
          %998 = vmatprep.subr.bf16.mxu0 0
          %999 = vmatpush2.bf16.msra.mxu0 0
          %1000 = vmatprep.subr.bf16.mxu0 0
          %1001 = vmatpush2.bf16.msra.mxu0 0
          %1002 = vmatprep.subr.bf16.mxu0 0
          %1003 = vmatpush2.bf16.msra.mxu0 0
          %1004 = vmatprep.subr.bf16.mxu0 0
          %1005 = vmatpush2.bf16.msra.mxu0 0
          %1006 = vmatprep.mubr.bf16.mxu0 0
          %1007 = vmatmul.mubr.bf16.gmra.mxu0 %v969
          %v1008 = vpop.f32.mrf.mxu0
          %v1009 = vadd.f32 %v963, %v1008
          %v1010 = vpop.f32.mrf.mxu0
          %v1011 = vpop.f32.mrf.mxu0
          %v1012 = vpop.f32.mrf.mxu0
          %1013 = vdwg.mxu0
          %v1014 = vadd.f32 %v519, %v1009
          %v1015 = vld [vmem:[%s5] sm:$0x1]
          %v1016 = vld [vmem:[%s6] sm:$0x1]
          %v1017 = vsel %vm537, %v1014, 0.0
          %1018 = vadd.xlane.f32.xlu0 %v1017
          %v1019 = vpop.xlane.xlu0 %1018
          %v1020 = vrcp.pop 32.0
          %v1021 = vmul.f32 %v1019, %v1020
          %v1022 = vsub.f32 %v1014, %v1021
          %v1023 = vmul.f32 %v1022, %v1022
          %v1024 = vsel %vm537, %v1023, 0.0
          %1025 = vadd.xlane.f32.xlu0 %v1024
          %v1026 = vpop.xlane.xlu0 %1025
          %v1027 = vmul.f32 %v1026, %v1020
          %v1028 = vadd.f32 %v1027, 1e-05
          %v1029 = vrsqrt.pop %v1028
          %v1030 = vmul.f32 %v1022, %v1029
          %v1032 = vlaneseq
          %v1033 = vshrl.u32 %v1032, 7
          %v1034 = vsub.s32 0, %v1033
          %v1035 = vrot.slane %v1015, %v1034
          %v1037 = vmul.f32 %v1030, %v1035
          %v1039 = vlaneseq
          %v1040 = vshrl.u32 %v1039, 7
          %v1041 = vsub.s32 0, %v1040
          %v1042 = vrot.slane %v1016, %v1041
          %v1044 = vadd.f32 %v1037, %v1042
          %1045 = vst.msk [vmem:[#allocation2] sm:$0xff] %vm537, %v1044
          %1046 = vst.msk [vmem:[#allocation3] sm:$0xff] %vm537, 0.0
        $region76: #{tpu_custom_call.1} parent=71 // pred_fallthru
          _
        %v1047 = vld [vmem:[#allocation2] sm:$0xff]
        %v1048 = vpack.c.bf16 %v1047, %v1047
        %v1049 = vld [vmem:[%s500] sm:$0xf]
        %v1050 = vld [vmem:[%s500 + $0x4] sm:$0xf]
        %v1051 = vld [vmem:[%s500 + $0x8] sm:$0xf]
        %v1052 = vld [vmem:[%s500 + $0xc] sm:$0xf]
        %v1053 = vld [vmem:[%s503] sm:$0x1]
        %v1055 = vlaneseq
        %v1056 = vshrl.u32 %v1055, 7
        %v1057 = vsub.s32 0, %v1056
        %v1058 = vrot.slane %v1053, %v1057
        %v1064 = vunpack.c.l.b16 %v1049
        %v1065 = vunpack.c.l.b16 %v1050
        %v1066 = vunpack.c.l.b16 %v1051
        %v1067 = vunpack.c.l.b16 %v1052
        %v1068 = vpack.c.b16 %v1065, %v1064
        %v1069 = vpack.c.b16 %v1067, %v1066
        %vm1072 = vcmask 261120
        %v1074 = vsel %vm1072, %v1048, 0
        %1076 = vmatprep.subr.bf16.mxu0 0
        %1077 = vmatpush1.bf16.msra.mxu0 0
        %1078 = vmatprep.subr.bf16.mxu0 0
        %1079 = vmatpush1.bf16.msra.mxu0 0
        %1080 = vmatprep.subr.bf16.mxu0 0
        %1081 = vmatpush1.bf16.msra.mxu0 0
        %1082 = vmatprep.subr.bf16.mxu0 0
        %1083 = vmatpush1.bf16.msra.mxu0 0
        %1084 = vmatprep.subr.bf16.mxu0 0
        %1085 = vmatpush1.bf16.msra.mxu0 0
        %1086 = vmatprep.subr.bf16.mxu0 0
        %1087 = vmatpush1.bf16.msra.mxu0 0
        %1088 = vmatprep.subr.bf16.mxu0 0
        %1089 = vmatpush1.bf16.msra.mxu0 %v1069
        %1090 = vmatprep.subr.bf16.mxu0 0
        %1091 = vmatpush1.bf16.msra.mxu0 %v1068
        %1092 = vmatprep.subr.bf16.mxu0 0
        %1093 = vmatpush2.bf16.msra.mxu0 0
        %1094 = vmatprep.subr.bf16.mxu0 0
        %1095 = vmatpush2.bf16.msra.mxu0 0
        %1096 = vmatprep.subr.bf16.mxu0 0
        %1097 = vmatpush2.bf16.msra.mxu0 0
        %1098 = vmatprep.subr.bf16.mxu0 0
        %1099 = vmatpush2.bf16.msra.mxu0 0
        %1100 = vmatprep.subr.bf16.mxu0 0
        %1101 = vmatpush2.bf16.msra.mxu0 0
        %1102 = vmatprep.subr.bf16.mxu0 0
        %1103 = vmatpush2.bf16.msra.mxu0 0
        %1104 = vmatprep.subr.bf16.mxu0 0
        %1105 = vmatpush2.bf16.msra.mxu0 0
        %1106 = vmatprep.subr.bf16.mxu0 0
        %1107 = vmatpush2.bf16.msra.mxu0 0
        %1108 = vmatprep.mubr.bf16.mxu0 0
        %1109 = vmatmul.mubr.bf16.gmra.mxu0 %v1074
        %v1110 = vpop.f32.mrf.mxu0
        %v1111 = vadd.f32 %v1058, %v1110
        %v1112 = vpop.f32.mrf.mxu0
        %v1113 = vpop.f32.mrf.mxu0
        %v1114 = vpop.f32.mrf.mxu0
        %1115 = vdwg.mxu0
        %v1116 = vmax.f32 %v1111, 0.0
        %v1117 = vld [vmem:[#allocation3] sm:$0xff]
        %v1118 = vpack.c.bf16 %v1116, %v1116
        %v1119 = vld [vmem:[%s508] sm:$0xf]
        %v1120 = vld [vmem:[%s508 + $0x4] sm:$0xf]
        %v1121 = vld [vmem:[%s508 + $0x8] sm:$0xf]
        %v1122 = vld [vmem:[%s508 + $0xc] sm:$0xf]
        %v1123 = vld [vmem:[%s508 + $0x10] sm:$0xf]
        %v1124 = vld [vmem:[%s508 + $0x14] sm:$0xf]
        %v1125 = vld [vmem:[%s508 + $0x18] sm:$0xf]
        %v1126 = vld [vmem:[%s508 + $0x1c] sm:$0xf]
        %v1135 = vunpack.c.l.b16 %v1119
        %v1136 = vunpack.c.l.b16 %v1120
        %v1137 = vunpack.c.l.b16 %v1121
        %v1138 = vunpack.c.l.b16 %v1122
        %v1139 = vunpack.c.l.b16 %v1123
        %v1140 = vunpack.c.l.b16 %v1124
        %v1141 = vunpack.c.l.b16 %v1125
        %v1142 = vunpack.c.l.b16 %v1126
        %v1143 = vpack.c.b16 %v1136, %v1135
        %v1144 = vpack.c.b16 %v1138, %v1137
        %v1145 = vpack.c.b16 %v1140, %v1139
        %v1146 = vpack.c.b16 %v1142, %v1141
        %vm1151 = vcmask 523264
        %v1153 = vsel %vm1151, %v1118, 0
        %1155 = vmatprep.subr.bf16.mxu0 0
        %1156 = vmatpush1.bf16.msra.mxu0 0
        %1157 = vmatprep.subr.bf16.mxu0 0
        %1158 = vmatpush1.bf16.msra.mxu0 0
        %1159 = vmatprep.subr.bf16.mxu0 0
        %1160 = vmatpush1.bf16.msra.mxu0 0
        %1161 = vmatprep.subr.bf16.mxu0 0
        %1162 = vmatpush1.bf16.msra.mxu0 0
        %1163 = vmatprep.subr.bf16.mxu0 0
        %1164 = vmatpush1.bf16.msra.mxu0 %v1146
        %1165 = vmatprep.subr.bf16.mxu0 0
        %1166 = vmatpush1.bf16.msra.mxu0 %v1145
        %1167 = vmatprep.subr.bf16.mxu0 0
        %1168 = vmatpush1.bf16.msra.mxu0 %v1144
        %1169 = vmatprep.subr.bf16.mxu0 0
        %1170 = vmatpush1.bf16.msra.mxu0 %v1143
        %1171 = vmatprep.subr.bf16.mxu0 0
        %1172 = vmatpush2.bf16.msra.mxu0 0
        %1173 = vmatprep.subr.bf16.mxu0 0
        %1174 = vmatpush2.bf16.msra.mxu0 0
        %1175 = vmatprep.subr.bf16.mxu0 0
        %1176 = vmatpush2.bf16.msra.mxu0 0
        %1177 = vmatprep.subr.bf16.mxu0 0
        %1178 = vmatpush2.bf16.msra.mxu0 0
        %1179 = vmatprep.subr.bf16.mxu0 0
        %1180 = vmatpush2.bf16.msra.mxu0 0
        %1181 = vmatprep.subr.bf16.mxu0 0
        %1182 = vmatpush2.bf16.msra.mxu0 0
        %1183 = vmatprep.subr.bf16.mxu0 0
        %1184 = vmatpush2.bf16.msra.mxu0 0
        %1185 = vmatprep.subr.bf16.mxu0 0
        %1186 = vmatpush2.bf16.msra.mxu0 0
        %1187 = vmatprep.mubr.bf16.mxu0 0
        %1188 = vmatmul.mubr.bf16.gmra.mxu0 %v1153
        %v1189 = vpop.f32.mrf.mxu0
        %v1190 = vadd.f32 0.0, %v1189
        %v1191 = vpop.f32.mrf.mxu0
        %v1192 = vpop.f32.mrf.mxu0
        %v1193 = vpop.f32.mrf.mxu0
        %1194 = vdwg.mxu0
        %v1195 = vadd.f32 %v1117, %v1190
        %1196 = vst.msk [vmem:[#allocation3] sm:$0xff] %vm1072, %v1195
        // Predicated region
        $region77: #{tpu_custom_call.1} parent=71 // pred_check
          %p1197 = pneg %p511
        $region78: #{tpu_custom_call.1} parent=71 // pred_check_branch
          %1199 = sbr.rel (%p1197) target = $region80
        $region79: #{tpu_custom_call.1} parent=71 // pred_region
          %v1200 = vld [vmem:[#allocation3] sm:$0xff]
          %v1201 = vld [vmem:[%s10] sm:$0x1]
          %v1203 = vlaneseq
          %v1204 = vshrl.u32 %v1203, 7
          %v1205 = vsub.s32 0, %v1204
          %v1206 = vrot.slane %v1201, %v1205
          %v1208 = vadd.f32 %v1200, %v1206
          %v1209 = vld [vmem:[#allocation2] sm:$0xff]
          %v1210 = vadd.f32 %v1209, %v1208
          %v1211 = vld [vmem:[%s11] sm:$0x1]
          %v1212 = vld [vmem:[%s12] sm:$0x1]
          %v1213 = vsel %vm1072, %v1210, 0.0
          %1214 = vadd.xlane.f32.xlu0 %v1213
          %v1215 = vpop.xlane.xlu0 %1214
          %v1216 = vrcp.pop 32.0
          %v1217 = vmul.f32 %v1215, %v1216
          %v1218 = vsub.f32 %v1210, %v1217
          %v1219 = vmul.f32 %v1218, %v1218
          %v1220 = vsel %vm1072, %v1219, 0.0
          %1221 = vadd.xlane.f32.xlu0 %v1220
          %v1222 = vpop.xlane.xlu0 %1221
          %v1223 = vmul.f32 %v1222, %v1216
          %v1224 = vadd.f32 %v1223, 1e-05
          %v1225 = vrsqrt.pop %v1224
          %v1226 = vmul.f32 %v1218, %v1225
          %v1228 = vlaneseq
          %v1229 = vshrl.u32 %v1228, 7
          %v1230 = vsub.s32 0, %v1229
          %v1231 = vrot.slane %v1211, %v1230
          %v1233 = vmul.f32 %v1226, %v1231
          %v1235 = vlaneseq
          %v1236 = vshrl.u32 %v1235, 7
          %v1237 = vsub.s32 0, %v1236
          %v1238 = vrot.slane %v1212, %v1237
          %v1240 = vadd.f32 %v1233, %v1238
          %1241 = vst.msk [vmem:[%s492] sm:$0xff] %vm1072, %v1240
        $region80: #{tpu_custom_call.1} parent=71 // pred_fallthru
          _
        %s1242 = sand.u32 %s349, 1
        %s1243 = scalar_lea.sflag [#allocation5], %s1242
        %s1244 = sand.u32 %s349, 1
        %s1245 = smul.addr %s1244, 8
        %s1246 = scalar_lea.vmem [#allocation4], %s1245
        // Predicated region
        $region81: #{tpu_custom_call.1} parent=71 // pred_check
          %p1247 = pneg %p359
        $region82: #{tpu_custom_call.1} parent=71 // pred_check_branch
          %1249 = sbr.rel (%p1247) target = $region84
        $region83: #{tpu_custom_call.1} parent=71 // pred_region
          %s1251 = ssub.s32 128, 128
          %1252 = vsyncadd %s1243, %s1251
          %s1253 = sadd.s32 %s33, %s32
          %s1254 = smul.addr %s1253, 128
          %s1255 = scalar_lea.hbm %s13, %s1254
          %s1257 = sshll.u32 %s1246, 4
          %s1258 = int_to_ptr.vmem [resolvable:$true] %s1257
          %1260 = dma.vmem_to_hbm [thread:$0]  %s1258, 128, %s1255, %s1243
        $region84: #{tpu_custom_call.1} parent=71 // pred_fallthru
          _
      $region72: #{tpu_custom_call.1} parent=5 // pred_fallthru
        _
      %p1261 = scmp.le.s32.totalorder 2, %s22
      // Predicated region
      $region85: #{tpu_custom_call.1} parent=5 // pred_check
        %p1262 = pneg %p1261
      $region86: #{tpu_custom_call.1} parent=5 // pred_check_branch
        %1264 = sbr.rel (%p1262) target = $region88
      $region87: #{tpu_custom_call.1} parent=5 // pred_region
        %s1265 = ssub.s32 %s22, 2
        // Predicated region
        $region89: #{tpu_custom_call.1} parent=87 // pred_check
          %p1266 = pneg %p365
        $region90: #{tpu_custom_call.1} parent=87 // pred_check_branch
          %1268 = sbr.rel (%p1266) target = $region92
        $region91: #{tpu_custom_call.1} parent=87 // pred_region
          %s1269 = sand.u32 %s350, 1
          %s1270 = scalar_lea.sflag [#allocation5], %s1269
          %s1271 = sand.u32 %s350, 1
          %s1272 = smul.addr %s1271, 8
          %s1273 = scalar_lea.vmem [#allocation4], %s1272
          %1274 = dma.done %s1270, 128
        $region92: #{tpu_custom_call.1} parent=87 // pred_fallthru
          _
      $region88: #{tpu_custom_call.1} parent=5 // pred_fallthru
        _
    $region6: #{tpu_custom_call.1} parent=1 // loop_footer
      %s26 = sadd.s32 1, %s22
    $region7: #{tpu_custom_call.1} parent=1 // loop_footer_branch
      %21 = sbr.rel target = $region3
    $region8: #{tpu_custom_call.1} parent=1 // loop_exit
      _
    %1275 = vsyncpa [#allocation5], 1
    %s1276 = scalar_lea.sflag [#allocation5], 1
    %1277 = vsyncpa %s1276, 1

</llo_original>
